<compile_context>
chip_gen: v7x
topology: tpu7x:2x2x1
jax: 0.10.0
libtpu: 0.0.40
codegen_flags: <defaults>
</compile_context>

<pallas_src>
import functools

import jax
import jax.numpy as jnp
from jax.experimental import pallas as pl
from jax.experimental.pallas import tpu as pltpu

LEAKY_SLOPE = 0.01
BN_EPS = 1e-5


# --------------------------------------------------------------------------- kernel
def _autoencoder_kernel(x_ref,
                        ew1_ref, et1_ref, ew2_ref, et2_ref, ew3_ref, eb3_ref,
                        dw1_ref, dt1_ref, dw2_ref, dt2_ref, dw3_ref, db3_ref,
                        lat_ref, rec_ref, *, compute_dtype):
    """Fused encoder+decoder MLP for one batch tile (6 MXU matmuls, f32 accumulation)."""

    slope = jnp.asarray(LEAKY_SLOPE, compute_dtype)

    def dense(h, w_ref, shift_ref):
        # BN scale already folded into w; shift = beta + (bias - running_mean) * scale.
        return jnp.dot(h, w_ref[...], preferred_element_type=jnp.float32) + shift_ref[...]

    def dense_act(h, w_ref, shift_ref):
        # LeakyReLU after the downcast: packed-bf16 VALU work on v6e/v7x, exact when f32.
        a = dense(h, w_ref, shift_ref).astype(compute_dtype)
        return jnp.maximum(a, slope * a)

    # In-kernel cast of the f32 input tile (no separate wrapper pad+cast HBM pass).
    x = x_ref[...].astype(compute_dtype)                              # (tb, D_p)

    # ----- encoder -----
    h = dense_act(x, ew1_ref, et1_ref)                                # (tb, 512)
    h = dense_act(h, ew2_ref, et2_ref)                                # (tb, 384)
    lat = dense(h, ew3_ref, eb3_ref)                                  # (tb, L_p) f32 acc
    lat_ref[...] = lat.astype(lat_ref.dtype)

    # ----- decoder -----
    g = dense_act(lat.astype(compute_dtype), dw1_ref, dt1_ref)        # (tb, 384)
    g = dense_act(g, dw2_ref, dt2_ref)                                # (tb, 512)
    rec = dense(g, dw3_ref, db3_ref)                                  # (tb, D_p) f32 acc
    rec_ref[...] = rec.astype(rec_ref.dtype)


# --------------------------------------------------------------------------- wrapper
def _round_up(n, m):
    return ((n + m - 1) // m) * m


def _pad2(a, rows, cols):
    return jnp.pad(a, ((0, rows - a.shape[0]), (0, cols - a.shape[1])))


def _pad_row(v, cols):
    return jnp.pad(v, (0, cols - v.shape[0]))[None, :]


def _fold_bn(w, b, g, beta, rm, rv, eps):
    """Fold eval-mode BatchNorm1d into the preceding Linear: y = x @ (w*s) + shift."""
    s = g * jax.lax.rsqrt(rv + eps)
    return w * s[None, :], beta + (b - rm) * s


def _prep_block(p, in_p, m1_p, m2_p, out_p, compute_dtype, eps):
    """Fold BN, zero-pad to lane multiples, cast weights to compute dtype."""
    w1, t1 = _fold_bn(p["w1"], p["b1"], p["g1"], p["beta1"], p["rm1"], p["rv1"], eps)
    w2, t2 = _fold_bn(p["w2"], p["b2"], p["g2"], p["beta2"], p["rm2"], p["rv2"], eps)
    w3, b3 = p["w3"], p["b3"]
    return (_pad2(w1, in_p, m1_p).astype(compute_dtype), _pad_row(t1, m1_p),
            _pad2(w2, m1_p, m2_p).astype(compute_dtype), _pad_row(t2, m2_p),
            _pad2(w3, m2_p, out_p).astype(compute_dtype), _pad_row(b3, out_p))


@functools.partial(jax.jit, static_argnames=("block_b", "compute_dtype", "out_dtype"))
def autoencoder_forward(x, params, block_b=512, compute_dtype=jnp.bfloat16, out_dtype=None):
    """Fused AutoEncoder forward. Returns (x_reconstructed, latent_vector).

    x: (B, input_dim) float32.  params: see init_autoencoder_params.
    out_dtype defaults to compute_dtype (bf16) to halve output HBM traffic.
    """
    if out_dtype is None:
        out_dtype = compute_dtype

    B, D = x.shape
    enc, dec = params["enc"], params["dec"]
    Hw = enc["w1"].shape[1]     # 500
    Hn = enc["w2"].shape[1]     # 300
    L = enc["w3"].shape[1]      # latent_dim

    # Lane-dense padded feature dims (multiples of 128).
    D_p, L_p = _round_up(D, 128), _round_up(L, 128)
    Hw_p, Hn_p = _round_up(Hw, 128), _round_up(Hn, 128)

    # Batch tile: multiple of 8, clamped so the grid has >=2 steps whenever the
    # batch allows it (both v7x TensorCores get work via "parallel" semantics).
    block_b = max(8, _round_up(block_b, 8))
    B8 = _round_up(B, 8)
    if B8 >= 16:
        block_b = min(block_b, max(8, (B8 // 2) // 8 * 8))
    else:
        block_b = min(block_b, B8)
    B_p = _round_up(B, block_b)

    enc_ops = _prep_block(enc, D_p, Hw_p, Hn_p, L_p, compute_dtype, BN_EPS)
    dec_ops = _prep_block(dec, L_p, Hn_p, Hw_p, D_p, compute_dtype, BN_EPS)

    # Pad only; the cast to compute_dtype happens inside the kernel.
    x_p = _pad2(x, B_p, D_p)

    grid = (B_p // block_b,)
    # Constant (grid-invariant) operands: single-buffered to save VMEM / useless DMAs.
    full = lambda r, c: pl.BlockSpec((r, c), lambda i: (0, 0), pipeline_mode=pl.Buffered(1))

    in_specs = [
        pl.BlockSpec((block_b, D_p), lambda i: (i, 0)),   # x tile (f32)
        full(D_p, Hw_p), full(1, Hw_p),                   # encoder layer 1 (w, shift)
        full(Hw_p, Hn_p), full(1, Hn_p),                  # encoder layer 2
        full(Hn_p, L_p), full(1, L_p),                    # encoder layer 3 (w, bias)
        full(L_p, Hn_p), full(1, Hn_p),                   # decoder layer 1
        full(Hn_p, Hw_p), full(1, Hw_p),                  # decoder layer 2
        full(Hw_p, D_p), full(1, D_p),                    # decoder layer 3
    ]
    out_specs = (
        pl.BlockSpec((block_b, L_p), lambda i: (i, 0)),   # latent (lane-dense)
        pl.BlockSpec((block_b, D_p), lambda i: (i, 0)),   # reconstruction (lane-dense)
    )
    out_shape = (
        jax.ShapeDtypeStruct((B_p, L_p), out_dtype),
        jax.ShapeDtypeStruct((B_p, D_p), out_dtype),
    )

    lat_p, rec_p = pl.pallas_call(
        functools.partial(_autoencoder_kernel, compute_dtype=compute_dtype),
        out_shape=out_shape,
        grid=grid,
        in_specs=in_specs,
        out_specs=out_specs,
        compiler_params=pltpu.CompilerParams(
            dimension_semantics=("parallel",),          # batch tiles shard across TCs (v7x)
            vmem_limit_bytes=32 * 1024 * 1024,          # raise v5e's 16 MiB scoped default
        ),
    )(x_p, *enc_ops, *dec_ops)

    return rec_p[:B, :D], lat_p[:B, :L]


# --------------------------------------------------------------------------- params / reference
def init_autoencoder_params(key, input_dim, latent_dim, h_wide=500, h_narrow=300):
    """Deterministic synthetic parameters matching the nn.Module shapes (weights as (in, out))."""

    def lin(kw, kb, fan_in, fan_out):
        bound = 1.0 / jnp.sqrt(fan_in)
        w = jax.random.uniform(kw, (fan_in, fan_out), jnp.float32, -bound, bound)
        b = jax.random.uniform(kb, (fan_out,), jnp.float32, -bound, bound)
        return w, b

    def block(k0, d_in, d_m1, d_m2, d_out):
        kk = jax.random.split(k0, 6)
        w1, b1 = lin(kk[0], kk[1], d_in, d_m1)
        w2, b2 = lin(kk[2], kk[3], d_m1, d_m2)
        w3, b3 = lin(kk[4], kk[5], d_m2, d_out)
        return dict(
            w1=w1, b1=b1,
            g1=jnp.ones((d_m1,), jnp.float32), beta1=jnp.zeros((d_m1,), jnp.float32),
            rm1=jnp.zeros((d_m1,), jnp.float32), rv1=jnp.ones((d_m1,), jnp.float32),
            w2=w2, b2=b2,
            g2=jnp.ones((d_m2,), jnp.float32), beta2=jnp.zeros((d_m2,), jnp.float32),
            rm2=jnp.zeros((d_m2,), jnp.float32), rv2=jnp.ones((d_m2,), jnp.float32),
            w3=w3, b3=b3,
        )

    ke, kd = jax.random.split(key)
    return dict(enc=block(ke, input_dim, h_wide, h_narrow, latent_dim),
                dec=block(kd, latent_dim, h_narrow, h_wide, input_dim))


def autoencoder_reference(x, params, eps=BN_EPS):
    """Pure-JAX f32 reference (eval-mode AutoEncoder)."""

    def bn(y, g, beta, rm, rv):
        return (y - rm) * jax.lax.rsqrt(rv + eps) * g + beta

    def lrelu(y):
        return jnp.where(y >= 0, y, LEAKY_SLOPE * y)

    e, d = params["enc"], params["dec"]
    h = lrelu(bn(x @ e["w1"] + e["b1"], e["g1"], e["beta1"], e["rm1"], e["rv1"]))
    h = lrelu(bn(h @ e["w2"] + e["b2"], e["g2"], e["beta2"], e["rm2"], e["rv2"]))
    lat = h @ e["w3"] + e["b3"]
    g = lrelu(bn(lat @ d["w1"] + d["b1"], d["g1"], d["beta1"], d["rm1"], d["rv1"]))
    g = lrelu(bn(g @ d["w2"] + d["b2"], d["g2"], d["beta2"], d["rm2"], d["rv2"]))
    rec = g @ d["w3"] + d["b3"]
    return rec, lat


# --------------------------------------------------------------------------- test
if __name__ == "__main__":
    key = jax.random.PRNGKey(0)
    k_x, k_p = jax.random.split(key)

    batch, input_dim, latent_dim = 16, 64, 32
    x = jax.random.normal(k_x, (batch, input_dim), jnp.float32)
    params = init_autoencoder_params(k_p, input_dim, latent_dim)

    rec_ref, lat_ref = autoencoder_reference(x, params)

    # Exact-semantics check: f32 compute + f32 outputs, tight tolerance.
    rec32, lat32 = autoencoder_forward(x, params, block_b=8,
                                       compute_dtype=jnp.float32, out_dtype=jnp.float32)
    jax.block_until_ready((rec32, lat32))
    assert rec32.shape == (batch, input_dim) and lat32.shape == (batch, latent_dim)
    assert jnp.allclose(rec32, rec_ref, atol=1e-4, rtol=1e-4), \
        float(jnp.max(jnp.abs(rec32 - rec_ref)))
    assert jnp.allclose(lat32, lat_ref, atol=1e-4, rtol=1e-4), \
        float(jnp.max(jnp.abs(lat32 - lat_ref)))

    # Performance-default path: bf16 inputs/weights/activations/outputs, f32 MXU accumulation.
    # Default block_b=512 is clamped to 8 here (B=16) so the grid has 2 steps -> both v7x TCs.
    rec16, lat16 = autoencoder_forward(x, params)
    jax.block_until_ready((rec16, lat16))
    assert rec16.shape == (batch, input_dim) and lat16.shape == (batch, latent_dim)
    assert float(jnp.max(jnp.abs(rec16.astype(jnp.float32) - rec_ref))) < 1e-1
    assert float(jnp.max(jnp.abs(lat16.astype(jnp.float32) - lat_ref))) < 1e-1

    print("KERNEL_OK")
</pallas_src>

<mosaic_0001>
module attributes {stable_mosaic.version = 11 : i64} {
  func.func @_autoencoder_kernel(%arg0: i32, %arg1: memref<8x128xf32, #tpu.memory_space<vmem>>, %arg2: memref<128x512xf32, #tpu.memory_space<vmem>>, %arg3: memref<1x512xf32, #tpu.memory_space<vmem>>, %arg4: memref<512x384xf32, #tpu.memory_space<vmem>>, %arg5: memref<1x384xf32, #tpu.memory_space<vmem>>, %arg6: memref<384x128xf32, #tpu.memory_space<vmem>>, %arg7: memref<1x128xf32, #tpu.memory_space<vmem>>, %arg8: memref<128x384xf32, #tpu.memory_space<vmem>>, %arg9: memref<1x384xf32, #tpu.memory_space<vmem>>, %arg10: memref<384x512xf32, #tpu.memory_space<vmem>>, %arg11: memref<1x512xf32, #tpu.memory_space<vmem>>, %arg12: memref<512x128xf32, #tpu.memory_space<vmem>>, %arg13: memref<1x128xf32, #tpu.memory_space<vmem>>, %arg14: memref<8x128xf32, #tpu.memory_space<vmem>>, %arg15: memref<8x128xf32, #tpu.memory_space<vmem>>) attributes {dimension_semantics = [#tpu.dimension_semantics<parallel>], iteration_bounds = array<i64: 2>, scalar_prefetch = 0 : i64, scratch_operands = 0 : i64, tpu.core_type = #tpu.core_type<tc>, window_params = [{transform_indices = @transform_0, window_bounds = array<i64: 8, 128>}, {pipeline_mode = #tpu.pipeline_mode<synchronous>, transform_indices = @transform_1, window_bounds = array<i64: 128, 512>}, {pipeline_mode = #tpu.pipeline_mode<synchronous>, transform_indices = @transform_2, window_bounds = array<i64: 1, 512>}, {pipeline_mode = #tpu.pipeline_mode<synchronous>, transform_indices = @transform_3, window_bounds = array<i64: 512, 384>}, {pipeline_mode = #tpu.pipeline_mode<synchronous>, transform_indices = @transform_4, window_bounds = array<i64: 1, 384>}, {pipeline_mode = #tpu.pipeline_mode<synchronous>, transform_indices = @transform_5, window_bounds = array<i64: 384, 128>}, {pipeline_mode = #tpu.pipeline_mode<synchronous>, transform_indices = @transform_6, window_bounds = array<i64: 1, 128>}, {pipeline_mode = #tpu.pipeline_mode<synchronous>, transform_indices = @transform_7, window_bounds = array<i64: 128, 384>}, {pipeline_mode = #tpu.pipeline_mode<synchronous>, transform_indices = @transform_8, window_bounds = array<i64: 1, 384>}, {pipeline_mode = #tpu.pipeline_mode<synchronous>, transform_indices = @transform_9, window_bounds = array<i64: 384, 512>}, {pipeline_mode = #tpu.pipeline_mode<synchronous>, transform_indices = @transform_10, window_bounds = array<i64: 1, 512>}, {pipeline_mode = #tpu.pipeline_mode<synchronous>, transform_indices = @transform_11, window_bounds = array<i64: 512, 128>}, {pipeline_mode = #tpu.pipeline_mode<synchronous>, transform_indices = @transform_12, window_bounds = array<i64: 1, 128>}, {transform_indices = @transform_13, window_bounds = array<i64: 8, 128>}, {transform_indices = @transform_14, window_bounds = array<i64: 8, 128>}]} {
    %c0 = arith.constant 0 : index
    %c0_0 = arith.constant 0 : index
    %0 = vector.load %arg1[%c0, %c0_0] : memref<8x128xf32, #tpu.memory_space<vmem>>, vector<8x128xf32>
    %c0_1 = arith.constant 0 : index
    %c0_2 = arith.constant 0 : index
    %1 = vector.load %arg2[%c0_1, %c0_2] : memref<128x512xf32, #tpu.memory_space<vmem>>, vector<128x512xf32>
    %cst = arith.constant dense<0.000000e+00> : vector<8x512xf32>
    %2 = tpu.matmul %0, %1, %cst {dimension_numbers = #tpu.dot_dimension_numbers<[1], [0], [0], [1], [0, 0, 1, 1], [], []>} : vector<8x128xf32>, vector<128x512xf32>, vector<8x512xf32> -> vector<8x512xf32>
    %c0_3 = arith.constant 0 : index
    %c0_4 = arith.constant 0 : index
    %3 = vector.load %arg3[%c0_3, %c0_4] : memref<1x512xf32, #tpu.memory_space<vmem>>, vector<1x512xf32>
    %4 = vector.broadcast %3 : vector<1x512xf32> to vector<8x512xf32>
    %5 = arith.addf %2, %4 : vector<8x512xf32>
    %cst_5 = arith.constant 0.00999999977 : f32
    %6 = vector.broadcast %cst_5 : f32 to vector<8x512xf32>
    %7 = arith.mulf %6, %5 : vector<8x512xf32>
    %8 = arith.maximumf %5, %7 : vector<8x512xf32>
    %c0_6 = arith.constant 0 : index
    %c0_7 = arith.constant 0 : index
    %9 = vector.load %arg4[%c0_6, %c0_7] : memref<512x384xf32, #tpu.memory_space<vmem>>, vector<512x384xf32>
    %cst_8 = arith.constant dense<0.000000e+00> : vector<8x384xf32>
    %10 = tpu.matmul %8, %9, %cst_8 {dimension_numbers = #tpu.dot_dimension_numbers<[1], [0], [0], [1], [0, 0, 1, 1], [], []>} : vector<8x512xf32>, vector<512x384xf32>, vector<8x384xf32> -> vector<8x384xf32>
    %c0_9 = arith.constant 0 : index
    %c0_10 = arith.constant 0 : index
    %11 = vector.load %arg5[%c0_9, %c0_10] : memref<1x384xf32, #tpu.memory_space<vmem>>, vector<1x384xf32>
    %12 = vector.broadcast %11 : vector<1x384xf32> to vector<8x384xf32>
    %13 = arith.addf %10, %12 : vector<8x384xf32>
    %cst_11 = arith.constant 0.00999999977 : f32
    %14 = vector.broadcast %cst_11 : f32 to vector<8x384xf32>
    %15 = arith.mulf %14, %13 : vector<8x384xf32>
    %16 = arith.maximumf %13, %15 : vector<8x384xf32>
    %c0_12 = arith.constant 0 : index
    %c0_13 = arith.constant 0 : index
    %17 = vector.load %arg6[%c0_12, %c0_13] : memref<384x128xf32, #tpu.memory_space<vmem>>, vector<384x128xf32>
    %cst_14 = arith.constant dense<0.000000e+00> : vector<8x128xf32>
    %18 = tpu.matmul %16, %17, %cst_14 {dimension_numbers = #tpu.dot_dimension_numbers<[1], [0], [0], [1], [0, 0, 1, 1], [], []>} : vector<8x384xf32>, vector<384x128xf32>, vector<8x128xf32> -> vector<8x128xf32>
    %c0_15 = arith.constant 0 : index
    %c0_16 = arith.constant 0 : index
    %19 = vector.load %arg7[%c0_15, %c0_16] : memref<1x128xf32, #tpu.memory_space<vmem>>, vector<1x128xf32>
    %20 = vector.broadcast %19 : vector<1x128xf32> to vector<8x128xf32>
    %21 = arith.addf %18, %20 : vector<8x128xf32>
    %c0_17 = arith.constant 0 : index
    %c0_18 = arith.constant 0 : index
    %22 = vector.load %arg14[%c0_17, %c0_18] : memref<8x128xf32, #tpu.memory_space<vmem>>, vector<8x128xf32>
    tpu.vector_store %arg14[%c0_17, %c0_18], %21 {strides = array<i32>} : memref<8x128xf32, #tpu.memory_space<vmem>>, vector<8x128xf32>,
    %c0_19 = arith.constant 0 : index
    %c0_20 = arith.constant 0 : index
    %23 = vector.load %arg8[%c0_19, %c0_20] : memref<128x384xf32, #tpu.memory_space<vmem>>, vector<128x384xf32>
    %cst_21 = arith.constant dense<0.000000e+00> : vector<8x384xf32>
    %24 = tpu.matmul %21, %23, %cst_21 {dimension_numbers = #tpu.dot_dimension_numbers<[1], [0], [0], [1], [0, 0, 1, 1], [], []>} : vector<8x128xf32>, vector<128x384xf32>, vector<8x384xf32> -> vector<8x384xf32>
    %c0_22 = arith.constant 0 : index
    %c0_23 = arith.constant 0 : index
    %25 = vector.load %arg9[%c0_22, %c0_23] : memref<1x384xf32, #tpu.memory_space<vmem>>, vector<1x384xf32>
    %26 = vector.broadcast %25 : vector<1x384xf32> to vector<8x384xf32>
    %27 = arith.addf %24, %26 : vector<8x384xf32>
    %cst_24 = arith.constant 0.00999999977 : f32
    %28 = vector.broadcast %cst_24 : f32 to vector<8x384xf32>
    %29 = arith.mulf %28, %27 : vector<8x384xf32>
    %30 = arith.maximumf %27, %29 : vector<8x384xf32>
    %c0_25 = arith.constant 0 : index
    %c0_26 = arith.constant 0 : index
    %31 = vector.load %arg10[%c0_25, %c0_26] : memref<384x512xf32, #tpu.memory_space<vmem>>, vector<384x512xf32>
    %cst_27 = arith.constant dense<0.000000e+00> : vector<8x512xf32>
    %32 = tpu.matmul %30, %31, %cst_27 {dimension_numbers = #tpu.dot_dimension_numbers<[1], [0], [0], [1], [0, 0, 1, 1], [], []>} : vector<8x384xf32>, vector<384x512xf32>, vector<8x512xf32> -> vector<8x512xf32>
    %c0_28 = arith.constant 0 : index
    %c0_29 = arith.constant 0 : index
    %33 = vector.load %arg11[%c0_28, %c0_29] : memref<1x512xf32, #tpu.memory_space<vmem>>, vector<1x512xf32>
    %34 = vector.broadcast %33 : vector<1x512xf32> to vector<8x512xf32>
    %35 = arith.addf %32, %34 : vector<8x512xf32>
    %cst_30 = arith.constant 0.00999999977 : f32
    %36 = vector.broadcast %cst_30 : f32 to vector<8x512xf32>
    %37 = arith.mulf %36, %35 : vector<8x512xf32>
    %38 = arith.maximumf %35, %37 : vector<8x512xf32>
    %c0_31 = arith.constant 0 : index
    %c0_32 = arith.constant 0 : index
    %39 = vector.load %arg12[%c0_31, %c0_32] : memref<512x128xf32, #tpu.memory_space<vmem>>, vector<512x128xf32>
    %cst_33 = arith.constant dense<0.000000e+00> : vector<8x128xf32>
    %40 = tpu.matmul %38, %39, %cst_33 {dimension_numbers = #tpu.dot_dimension_numbers<[1], [0], [0], [1], [0, 0, 1, 1], [], []>} : vector<8x512xf32>, vector<512x128xf32>, vector<8x128xf32> -> vector<8x128xf32>
    %c0_34 = arith.constant 0 : index
    %c0_35 = arith.constant 0 : index
    %41 = vector.load %arg13[%c0_34, %c0_35] : memref<1x128xf32, #tpu.memory_space<vmem>>, vector<1x128xf32>
    %42 = vector.broadcast %41 : vector<1x128xf32> to vector<8x128xf32>
    %43 = arith.addf %40, %42 : vector<8x128xf32>
    %c0_36 = arith.constant 0 : index
    %c0_37 = arith.constant 0 : index
    %44 = vector.load %arg15[%c0_36, %c0_37] : memref<8x128xf32, #tpu.memory_space<vmem>>, vector<8x128xf32>
    tpu.vector_store %arg15[%c0_36, %c0_37], %43 {strides = array<i32>} : memref<8x128xf32, #tpu.memory_space<vmem>>, vector<8x128xf32>,
    return
  }
  func.func @transform_0(%arg0: i32) -> (i32, i32) {
    %c0_i32 = arith.constant 0 : i32
    %c0_i32_0 = arith.constant 0 : i32
    return %arg0, %c0_i32 : i32, i32
  }
  func.func @transform_1(%arg0: i32) -> (i32, i32) {
    %c0_i32 = arith.constant 0 : i32
    %c0_i32_0 = arith.constant 0 : i32
    %c0_i32_1 = arith.constant 0 : i32
    return %c0_i32, %c0_i32_0 : i32, i32
  }
  func.func @transform_2(%arg0: i32) -> (i32, i32) {
    %c0_i32 = arith.constant 0 : i32
    %c0_i32_0 = arith.constant 0 : i32
    %c0_i32_1 = arith.constant 0 : i32
    return %c0_i32, %c0_i32_0 : i32, i32
  }
  func.func @transform_3(%arg0: i32) -> (i32, i32) {
    %c0_i32 = arith.constant 0 : i32
    %c0_i32_0 = arith.constant 0 : i32
    %c0_i32_1 = arith.constant 0 : i32
    return %c0_i32, %c0_i32_0 : i32, i32
  }
  func.func @transform_4(%arg0: i32) -> (i32, i32) {
    %c0_i32 = arith.constant 0 : i32
    %c0_i32_0 = arith.constant 0 : i32
    %c0_i32_1 = arith.constant 0 : i32
    return %c0_i32, %c0_i32_0 : i32, i32
  }
  func.func @transform_5(%arg0: i32) -> (i32, i32) {
    %c0_i32 = arith.constant 0 : i32
    %c0_i32_0 = arith.constant 0 : i32
    %c0_i32_1 = arith.constant 0 : i32
    return %c0_i32, %c0_i32_0 : i32, i32
  }
  func.func @transform_6(%arg0: i32) -> (i32, i32) {
    %c0_i32 = arith.constant 0 : i32
    %c0_i32_0 = arith.constant 0 : i32
    %c0_i32_1 = arith.constant 0 : i32
    return %c0_i32, %c0_i32_0 : i32, i32
  }
  func.func @transform_7(%arg0: i32) -> (i32, i32) {
    %c0_i32 = arith.constant 0 : i32
    %c0_i32_0 = arith.constant 0 : i32
    %c0_i32_1 = arith.constant 0 : i32
    return %c0_i32, %c0_i32_0 : i32, i32
  }
  func.func @transform_8(%arg0: i32) -> (i32, i32) {
    %c0_i32 = arith.constant 0 : i32
    %c0_i32_0 = arith.constant 0 : i32
    %c0_i32_1 = arith.constant 0 : i32
    return %c0_i32, %c0_i32_0 : i32, i32
  }
  func.func @transform_9(%arg0: i32) -> (i32, i32) {
    %c0_i32 = arith.constant 0 : i32
    %c0_i32_0 = arith.constant 0 : i32
    %c0_i32_1 = arith.constant 0 : i32
    return %c0_i32, %c0_i32_0 : i32, i32
  }
  func.func @transform_10(%arg0: i32) -> (i32, i32) {
    %c0_i32 = arith.constant 0 : i32
    %c0_i32_0 = arith.constant 0 : i32
    %c0_i32_1 = arith.constant 0 : i32
    return %c0_i32, %c0_i32_0 : i32, i32
  }
  func.func @transform_11(%arg0: i32) -> (i32, i32) {
    %c0_i32 = arith.constant 0 : i32
    %c0_i32_0 = arith.constant 0 : i32
    %c0_i32_1 = arith.constant 0 : i32
    return %c0_i32, %c0_i32_0 : i32, i32
  }
  func.func @transform_12(%arg0: i32) -> (i32, i32) {
    %c0_i32 = arith.constant 0 : i32
    %c0_i32_0 = arith.constant 0 : i32
    %c0_i32_1 = arith.constant 0 : i32
    return %c0_i32, %c0_i32_0 : i32, i32
  }
  func.func @transform_13(%arg0: i32) -> (i32, i32) {
    %c0_i32 = arith.constant 0 : i32
    %c0_i32_0 = arith.constant 0 : i32
    return %arg0, %c0_i32 : i32, i32
  }
  func.func @transform_14(%arg0: i32) -> (i32, i32) {
    %c0_i32 = arith.constant 0 : i32
    %c0_i32_0 = arith.constant 0 : i32
    return %arg0, %c0_i32 : i32, i32
  }
}

</mosaic_0001>

<llo_original>
// kernel: autoencoder_forward.1
$region0: #{autoencoder_forward.1}
  #allocation0 [shape = 'u32[]', space=smem, size = 0x4, offset = 0x4, fixed_abs, tag = 'smem constant byte address 0x4 - core index']
  #allocation1 [shape = 'u32[144,128]{1,0:T(1,128)}', space=vmem, size = 0x12000, scoped, tag = 'internal scratch']
  %s0 = inlined_call_operand.vmem [shape: f32[16,128], index: 0, kind: input, shape index: {}]
  %s1 = inlined_call_operand.vmem [shape: f32[128,512], index: 1, kind: input, shape index: {}]
  %s2 = inlined_call_operand.vmem [shape: f32[1,512], index: 2, kind: input, shape index: {}]
  %s3 = inlined_call_operand.vmem [shape: f32[512,384], index: 3, kind: input, shape index: {}]
  %s4 = inlined_call_operand.vmem [shape: f32[1,384], index: 4, kind: input, shape index: {}]
  %s5 = inlined_call_operand.vmem [shape: f32[384,128], index: 5, kind: input, shape index: {}]
  %s6 = inlined_call_operand.vmem [shape: f32[1,128], index: 6, kind: input, shape index: {}]
  %s7 = inlined_call_operand.vmem [shape: f32[128,384], index: 7, kind: input, shape index: {}]
  %s8 = inlined_call_operand.vmem [shape: f32[1,384], index: 8, kind: input, shape index: {}]
  %s9 = inlined_call_operand.vmem [shape: f32[384,512], index: 9, kind: input, shape index: {}]
  %s10 = inlined_call_operand.vmem [shape: f32[1,512], index: 10, kind: input, shape index: {}]
  %s11 = inlined_call_operand.vmem [shape: f32[512,128], index: 11, kind: input, shape index: {}]
  %s12 = inlined_call_operand.vmem [shape: f32[1,128], index: 12, kind: input, shape index: {}]
  %s13 = inlined_call_operand.hbm [shape: f32[16,128], index: 13, kind: output, shape index: {0}]
  %s14 = inlined_call_operand.hbm [shape: f32[16,128], index: 14, kind: output, shape index: {1}]
  %15 = xla_tuple %s13, %s14
  %s16 = sld [smem:[#allocation0]]
  $region93: #{autoencoder_forward.1} parent=0
    _
  %s18 = ssub.s32 1, %s16
  %s19 = scalar_select 0, %s18, %s16
  $region1: #{autoencoder_forward.1} parent=0
    #allocation2 [shape = 'u8[8192]{0}', space=vmem, size = 0x2000, scoped, tag = 'output window, operand 0']
    #allocation3 [shape = 's32[2]{0}', space=sflag, size = 0x8, scoped, tag = 'scoped memory for autoencoder_forward.1']
    #allocation4 [shape = 'u8[8192]{0}', space=vmem, size = 0x2000, scoped, tag = 'output window, operand 1']
    #allocation5 [shape = 's32[2]{0}', space=sflag, size = 0x8, scoped, tag = 'scoped memory for autoencoder_forward.1']
    %20 = vsyncpa [#allocation3], 0
    %s21 = scalar_lea.sflag [#allocation3], 1
    %22 = vsyncpa %s21, 0
    %23 = vsyncpa [#allocation5], 0
    %s24 = scalar_lea.sflag [#allocation5], 1
    %25 = vsyncpa %s24, 0
    loop: start=0, step=1, limit=4
    $region2: #{autoencoder_forward.1} parent=1 // loop_pre_header
      _
    $region3: #{autoencoder_forward.1} parent=1 // loop_header
      %s27 = sphi 0, %s31
      %p28 = scmp.ge.s32.totalorder %s27, 4
      %s37 = sphi 0, %s39
      %s40 = sphi 0, %s37
      %s41 = sphi 0, %s40
      %s57 = sphi 0, %s41
      %s61 = sphi 0, %s61
      %s63 = sphi 0, %s61
      %s64 = sphi 0, %s63
      %s78 = sphi 0, %s64
      %s82 = sphi 0, %s82
      %s84 = sphi 0, %s82
      %s85 = sphi 0, %s84
      %s99 = sphi 0, %s85
      %s103 = sphi 0, %s103
      %s105 = sphi 0, %s103
      %s106 = sphi 0, %s105
      %s120 = sphi 0, %s106
      %s124 = sphi 0, %s124
      %s126 = sphi 0, %s124
      %s127 = sphi 0, %s126
      %s141 = sphi 0, %s127
      %s145 = sphi 0, %s145
      %s147 = sphi 0, %s145
      %s148 = sphi 0, %s147
      %s162 = sphi 0, %s148
      %s166 = sphi 0, %s166
      %s168 = sphi 0, %s166
      %s169 = sphi 0, %s168
      %s183 = sphi 0, %s169
      %s187 = sphi 0, %s187
      %s189 = sphi 0, %s187
      %s190 = sphi 0, %s189
      %s204 = sphi 0, %s190
      %s208 = sphi 0, %s208
      %s210 = sphi 0, %s208
      %s211 = sphi 0, %s210
      %s225 = sphi 0, %s211
      %s229 = sphi 0, %s229
      %s231 = sphi 0, %s229
      %s232 = sphi 0, %s231
      %s246 = sphi 0, %s232
      %s250 = sphi 0, %s250
      %s252 = sphi 0, %s250
      %s253 = sphi 0, %s252
      %s267 = sphi 0, %s253
      %s271 = sphi 0, %s271
      %s273 = sphi 0, %s271
      %s274 = sphi 0, %s273
      %s288 = sphi 0, %s274
      %s292 = sphi 0, %s292
      %s294 = sphi 0, %s292
      %s295 = sphi 0, %s294
      %s309 = sphi 0, %s295
      %s315 = sphi 0, %s317
      %s318 = sphi 0, %s315
      %s319 = sphi 0, %s318
      %s335 = sphi 0, %s319
      %s341 = sphi 0, %s343
      %s344 = sphi 0, %s341
      %s345 = sphi 0, %s344
      %s361 = sphi 0, %s345
    $region4: #{autoencoder_forward.1} parent=1 // loop_header_branch
      %30 = sbr.rel (%p28) target = $region8
    $region5: #{autoencoder_forward.1} parent=1 // loop_body
      %s32 = ssub.s32 %s27, 1
      %s33 = ssub.s32 %s27, 2
      %s34 = sadd.s32 %s27, 1
      %s35 = ssub.s32 %s27, %s34
      %p36 = scmp.eq.s32.totalorder %s35, 0
      %s38 = sadd.s32 %s37, 1
      %s39 = scalar_select %p36, %s37, %s38
      %p42 = pneg %p36
      %p43 = scmp.eq.s32.totalorder %s27, 1
      %p44 = por %p42, %p43
      %p45 = scmp.ne.s32.totalorder %s37, %s40
      %p46 = scmp.eq.s32.totalorder %s27, 0
      %p47 = por %p45, %p46
      %p48 = scmp.ne.s32.totalorder %s37, %s40
      %p49 = scmp.eq.s32.totalorder %s32, 1
      %p50 = por %p48, %p49
      %p51 = scmp.ne.s32.totalorder %s40, %s41
      %p52 = scmp.eq.s32.totalorder %s32, 0
      %p53 = por %p51, %p52
      %p54 = scmp.ne.s32.totalorder %s40, %s41
      %p55 = scmp.eq.s32.totalorder %s33, 1
      %p56 = por %p54, %p55
      %p58 = scmp.ne.s32.totalorder %s41, %s57
      %p59 = scmp.eq.s32.totalorder %s33, 0
      %p60 = por %p58, %p59
      %s62 = sadd.s32 %s61, 1
      %p65 = scmp.eq.s32.totalorder %s27, 1
      %p66 = scmp.ne.s32.totalorder %s61, %s63
      %p67 = scmp.eq.s32.totalorder %s27, 0
      %p68 = por %p66, %p67
      %p69 = scmp.ne.s32.totalorder %s61, %s63
      %p70 = scmp.eq.s32.totalorder %s32, 1
      %p71 = por %p69, %p70
      %p72 = scmp.ne.s32.totalorder %s63, %s64
      %p73 = scmp.eq.s32.totalorder %s32, 0
      %p74 = por %p72, %p73
      %p75 = scmp.ne.s32.totalorder %s63, %s64
      %p76 = scmp.eq.s32.totalorder %s33, 1
      %p77 = por %p75, %p76
      %p79 = scmp.ne.s32.totalorder %s64, %s78
      %p80 = scmp.eq.s32.totalorder %s33, 0
      %p81 = por %p79, %p80
      %s83 = sadd.s32 %s82, 1
      %p86 = scmp.eq.s32.totalorder %s27, 1
      %p87 = scmp.ne.s32.totalorder %s82, %s84
      %p88 = scmp.eq.s32.totalorder %s27, 0
      %p89 = por %p87, %p88
      %p90 = scmp.ne.s32.totalorder %s82, %s84
      %p91 = scmp.eq.s32.totalorder %s32, 1
      %p92 = por %p90, %p91
      %p93 = scmp.ne.s32.totalorder %s84, %s85
      %p94 = scmp.eq.s32.totalorder %s32, 0
      %p95 = por %p93, %p94
      %p96 = scmp.ne.s32.totalorder %s84, %s85
      %p97 = scmp.eq.s32.totalorder %s33, 1
      %p98 = por %p96, %p97
      %p100 = scmp.ne.s32.totalorder %s85, %s99
      %p101 = scmp.eq.s32.totalorder %s33, 0
      %p102 = por %p100, %p101
      %s104 = sadd.s32 %s103, 1
      %p107 = scmp.eq.s32.totalorder %s27, 1
      %p108 = scmp.ne.s32.totalorder %s103, %s105
      %p109 = scmp.eq.s32.totalorder %s27, 0
      %p110 = por %p108, %p109
      %p111 = scmp.ne.s32.totalorder %s103, %s105
      %p112 = scmp.eq.s32.totalorder %s32, 1
      %p113 = por %p111, %p112
      %p114 = scmp.ne.s32.totalorder %s105, %s106
      %p115 = scmp.eq.s32.totalorder %s32, 0
      %p116 = por %p114, %p115
      %p117 = scmp.ne.s32.totalorder %s105, %s106
      %p118 = scmp.eq.s32.totalorder %s33, 1
      %p119 = por %p117, %p118
      %p121 = scmp.ne.s32.totalorder %s106, %s120
      %p122 = scmp.eq.s32.totalorder %s33, 0
      %p123 = por %p121, %p122
      %s125 = sadd.s32 %s124, 1
      %p128 = scmp.eq.s32.totalorder %s27, 1
      %p129 = scmp.ne.s32.totalorder %s124, %s126
      %p130 = scmp.eq.s32.totalorder %s27, 0
      %p131 = por %p129, %p130
      %p132 = scmp.ne.s32.totalorder %s124, %s126
      %p133 = scmp.eq.s32.totalorder %s32, 1
      %p134 = por %p132, %p133
      %p135 = scmp.ne.s32.totalorder %s126, %s127
      %p136 = scmp.eq.s32.totalorder %s32, 0
      %p137 = por %p135, %p136
      %p138 = scmp.ne.s32.totalorder %s126, %s127
      %p139 = scmp.eq.s32.totalorder %s33, 1
      %p140 = por %p138, %p139
      %p142 = scmp.ne.s32.totalorder %s127, %s141
      %p143 = scmp.eq.s32.totalorder %s33, 0
      %p144 = por %p142, %p143
      %s146 = sadd.s32 %s145, 1
      %p149 = scmp.eq.s32.totalorder %s27, 1
      %p150 = scmp.ne.s32.totalorder %s145, %s147
      %p151 = scmp.eq.s32.totalorder %s27, 0
      %p152 = por %p150, %p151
      %p153 = scmp.ne.s32.totalorder %s145, %s147
      %p154 = scmp.eq.s32.totalorder %s32, 1
      %p155 = por %p153, %p154
      %p156 = scmp.ne.s32.totalorder %s147, %s148
      %p157 = scmp.eq.s32.totalorder %s32, 0
      %p158 = por %p156, %p157
      %p159 = scmp.ne.s32.totalorder %s147, %s148
      %p160 = scmp.eq.s32.totalorder %s33, 1
      %p161 = por %p159, %p160
      %p163 = scmp.ne.s32.totalorder %s148, %s162
      %p164 = scmp.eq.s32.totalorder %s33, 0
      %p165 = por %p163, %p164
      %s167 = sadd.s32 %s166, 1
      %p170 = scmp.eq.s32.totalorder %s27, 1
      %p171 = scmp.ne.s32.totalorder %s166, %s168
      %p172 = scmp.eq.s32.totalorder %s27, 0
      %p173 = por %p171, %p172
      %p174 = scmp.ne.s32.totalorder %s166, %s168
      %p175 = scmp.eq.s32.totalorder %s32, 1
      %p176 = por %p174, %p175
      %p177 = scmp.ne.s32.totalorder %s168, %s169
      %p178 = scmp.eq.s32.totalorder %s32, 0
      %p179 = por %p177, %p178
      %p180 = scmp.ne.s32.totalorder %s168, %s169
      %p181 = scmp.eq.s32.totalorder %s33, 1
      %p182 = por %p180, %p181
      %p184 = scmp.ne.s32.totalorder %s169, %s183
      %p185 = scmp.eq.s32.totalorder %s33, 0
      %p186 = por %p184, %p185
      %s188 = sadd.s32 %s187, 1
      %p191 = scmp.eq.s32.totalorder %s27, 1
      %p192 = scmp.ne.s32.totalorder %s187, %s189
      %p193 = scmp.eq.s32.totalorder %s27, 0
      %p194 = por %p192, %p193
      %p195 = scmp.ne.s32.totalorder %s187, %s189
      %p196 = scmp.eq.s32.totalorder %s32, 1
      %p197 = por %p195, %p196
      %p198 = scmp.ne.s32.totalorder %s189, %s190
      %p199 = scmp.eq.s32.totalorder %s32, 0
      %p200 = por %p198, %p199
      %p201 = scmp.ne.s32.totalorder %s189, %s190
      %p202 = scmp.eq.s32.totalorder %s33, 1
      %p203 = por %p201, %p202
      %p205 = scmp.ne.s32.totalorder %s190, %s204
      %p206 = scmp.eq.s32.totalorder %s33, 0
      %p207 = por %p205, %p206
      %s209 = sadd.s32 %s208, 1
      %p212 = scmp.eq.s32.totalorder %s27, 1
      %p213 = scmp.ne.s32.totalorder %s208, %s210
      %p214 = scmp.eq.s32.totalorder %s27, 0
      %p215 = por %p213, %p214
      %p216 = scmp.ne.s32.totalorder %s208, %s210
      %p217 = scmp.eq.s32.totalorder %s32, 1
      %p218 = por %p216, %p217
      %p219 = scmp.ne.s32.totalorder %s210, %s211
      %p220 = scmp.eq.s32.totalorder %s32, 0
      %p221 = por %p219, %p220
      %p222 = scmp.ne.s32.totalorder %s210, %s211
      %p223 = scmp.eq.s32.totalorder %s33, 1
      %p224 = por %p222, %p223
      %p226 = scmp.ne.s32.totalorder %s211, %s225
      %p227 = scmp.eq.s32.totalorder %s33, 0
      %p228 = por %p226, %p227
      %s230 = sadd.s32 %s229, 1
      %p233 = scmp.eq.s32.totalorder %s27, 1
      %p234 = scmp.ne.s32.totalorder %s229, %s231
      %p235 = scmp.eq.s32.totalorder %s27, 0
      %p236 = por %p234, %p235
      %p237 = scmp.ne.s32.totalorder %s229, %s231
      %p238 = scmp.eq.s32.totalorder %s32, 1
      %p239 = por %p237, %p238
      %p240 = scmp.ne.s32.totalorder %s231, %s232
      %p241 = scmp.eq.s32.totalorder %s32, 0
      %p242 = por %p240, %p241
      %p243 = scmp.ne.s32.totalorder %s231, %s232
      %p244 = scmp.eq.s32.totalorder %s33, 1
      %p245 = por %p243, %p244
      %p247 = scmp.ne.s32.totalorder %s232, %s246
      %p248 = scmp.eq.s32.totalorder %s33, 0
      %p249 = por %p247, %p248
      %s251 = sadd.s32 %s250, 1
      %p254 = scmp.eq.s32.totalorder %s27, 1
      %p255 = scmp.ne.s32.totalorder %s250, %s252
      %p256 = scmp.eq.s32.totalorder %s27, 0
      %p257 = por %p255, %p256
      %p258 = scmp.ne.s32.totalorder %s250, %s252
      %p259 = scmp.eq.s32.totalorder %s32, 1
      %p260 = por %p258, %p259
      %p261 = scmp.ne.s32.totalorder %s252, %s253
      %p262 = scmp.eq.s32.totalorder %s32, 0
      %p263 = por %p261, %p262
      %p264 = scmp.ne.s32.totalorder %s252, %s253
      %p265 = scmp.eq.s32.totalorder %s33, 1
      %p266 = por %p264, %p265
      %p268 = scmp.ne.s32.totalorder %s253, %s267
      %p269 = scmp.eq.s32.totalorder %s33, 0
      %p270 = por %p268, %p269
      %s272 = sadd.s32 %s271, 1
      %p275 = scmp.eq.s32.totalorder %s27, 1
      %p276 = scmp.ne.s32.totalorder %s271, %s273
      %p277 = scmp.eq.s32.totalorder %s27, 0
      %p278 = por %p276, %p277
      %p279 = scmp.ne.s32.totalorder %s271, %s273
      %p280 = scmp.eq.s32.totalorder %s32, 1
      %p281 = por %p279, %p280
      %p282 = scmp.ne.s32.totalorder %s273, %s274
      %p283 = scmp.eq.s32.totalorder %s32, 0
      %p284 = por %p282, %p283
      %p285 = scmp.ne.s32.totalorder %s273, %s274
      %p286 = scmp.eq.s32.totalorder %s33, 1
      %p287 = por %p285, %p286
      %p289 = scmp.ne.s32.totalorder %s274, %s288
      %p290 = scmp.eq.s32.totalorder %s33, 0
      %p291 = por %p289, %p290
      %s293 = sadd.s32 %s292, 1
      %p296 = scmp.eq.s32.totalorder %s27, 1
      %p297 = scmp.ne.s32.totalorder %s292, %s294
      %p298 = scmp.eq.s32.totalorder %s27, 0
      %p299 = por %p297, %p298
      %p300 = scmp.ne.s32.totalorder %s292, %s294
      %p301 = scmp.eq.s32.totalorder %s32, 1
      %p302 = por %p300, %p301
      %p303 = scmp.ne.s32.totalorder %s294, %s295
      %p304 = scmp.eq.s32.totalorder %s32, 0
      %p305 = por %p303, %p304
      %p306 = scmp.ne.s32.totalorder %s294, %s295
      %p307 = scmp.eq.s32.totalorder %s33, 1
      %p308 = por %p306, %p307
      %p310 = scmp.ne.s32.totalorder %s295, %s309
      %p311 = scmp.eq.s32.totalorder %s33, 0
      %p312 = por %p310, %p311
      %s313 = ssub.s32 %s27, %s34
      %p314 = scmp.eq.s32.totalorder %s313, 0
      %s316 = sadd.s32 %s315, 1
      %s317 = scalar_select %p314, %s315, %s316
      %p320 = pneg %p314
      %p321 = scmp.eq.s32.totalorder %s27, 1
      %p322 = por %p320, %p321
      %p323 = scmp.ne.s32.totalorder %s315, %s318
      %p324 = scmp.eq.s32.totalorder %s27, 0
      %p325 = por %p323, %p324
      %p326 = scmp.ne.s32.totalorder %s315, %s318
      %p327 = scmp.eq.s32.totalorder %s32, 1
      %p328 = por %p326, %p327
      %p329 = scmp.ne.s32.totalorder %s318, %s319
      %p330 = scmp.eq.s32.totalorder %s32, 0
      %p331 = por %p329, %p330
      %p332 = scmp.ne.s32.totalorder %s318, %s319
      %p333 = scmp.eq.s32.totalorder %s33, 1
      %p334 = por %p332, %p333
      %p336 = scmp.ne.s32.totalorder %s319, %s335
      %p337 = scmp.eq.s32.totalorder %s33, 0
      %p338 = por %p336, %p337
      %s339 = ssub.s32 %s27, %s34
      %p340 = scmp.eq.s32.totalorder %s339, 0
      %s342 = sadd.s32 %s341, 1
      %s343 = scalar_select %p340, %s341, %s342
      %p346 = pneg %p340
      %p347 = scmp.eq.s32.totalorder %s27, 1
      %p348 = por %p346, %p347
      %p349 = scmp.ne.s32.totalorder %s341, %s344
      %p350 = scmp.eq.s32.totalorder %s27, 0
      %p351 = por %p349, %p350
      %p352 = scmp.ne.s32.totalorder %s341, %s344
      %p353 = scmp.eq.s32.totalorder %s32, 1
      %p354 = por %p352, %p353
      %p355 = scmp.ne.s32.totalorder %s344, %s345
      %p356 = scmp.eq.s32.totalorder %s32, 0
      %p357 = por %p355, %p356
      %p358 = scmp.ne.s32.totalorder %s344, %s345
      %p359 = scmp.eq.s32.totalorder %s33, 1
      %p360 = por %p358, %p359
      %p362 = scmp.ne.s32.totalorder %s345, %s361
      %p363 = scmp.eq.s32.totalorder %s33, 0
      %p364 = por %p362, %p363
      %p365 = scmp.le.s32.totalorder 1, %s27
      %p366 = scmp.lt.s32.totalorder %s27, 3
      %p367 = pnand %p365, %p366
      %p368 = pneg %p367
      // Predicated region
      $region9: #{autoencoder_forward.1} parent=5 // pred_check
        _
      $region10: #{autoencoder_forward.1} parent=5 // pred_check_branch
        %370 = sbr.rel (%p367) target = $region12
      $region11: #{autoencoder_forward.1} parent=5 // pred_region
        %s371 = ssub.s32 %s27, 1
        // Predicated region
        $region13: #{autoencoder_forward.1} parent=11 // pred_check
          %p372 = pneg %p74
        $region14: #{autoencoder_forward.1} parent=11 // pred_check_branch
          %374 = sbr.rel (%p372) target = $region16
        $region15: #{autoencoder_forward.1} parent=11 // pred_region
          _
        $region16: #{autoencoder_forward.1} parent=11 // pred_fallthru
          _
        // Predicated region
        $region17: #{autoencoder_forward.1} parent=11 // pred_check
          %p375 = pneg %p95
        $region18: #{autoencoder_forward.1} parent=11 // pred_check_branch
          %377 = sbr.rel (%p375) target = $region20
        $region19: #{autoencoder_forward.1} parent=11 // pred_region
          _
        $region20: #{autoencoder_forward.1} parent=11 // pred_fallthru
          _
        // Predicated region
        $region21: #{autoencoder_forward.1} parent=11 // pred_check
          %p378 = pneg %p116
        $region22: #{autoencoder_forward.1} parent=11 // pred_check_branch
          %380 = sbr.rel (%p378) target = $region24
        $region23: #{autoencoder_forward.1} parent=11 // pred_region
          _
        $region24: #{autoencoder_forward.1} parent=11 // pred_fallthru
          _
        // Predicated region
        $region25: #{autoencoder_forward.1} parent=11 // pred_check
          %p381 = pneg %p137
        $region26: #{autoencoder_forward.1} parent=11 // pred_check_branch
          %383 = sbr.rel (%p381) target = $region28
        $region27: #{autoencoder_forward.1} parent=11 // pred_region
          _
        $region28: #{autoencoder_forward.1} parent=11 // pred_fallthru
          _
        // Predicated region
        $region29: #{autoencoder_forward.1} parent=11 // pred_check
          %p384 = pneg %p158
        $region30: #{autoencoder_forward.1} parent=11 // pred_check_branch
          %386 = sbr.rel (%p384) target = $region32
        $region31: #{autoencoder_forward.1} parent=11 // pred_region
          _
        $region32: #{autoencoder_forward.1} parent=11 // pred_fallthru
          _
        // Predicated region
        $region33: #{autoencoder_forward.1} parent=11 // pred_check
          %p387 = pneg %p179
        $region34: #{autoencoder_forward.1} parent=11 // pred_check_branch
          %389 = sbr.rel (%p387) target = $region36
        $region35: #{autoencoder_forward.1} parent=11 // pred_region
          _
        $region36: #{autoencoder_forward.1} parent=11 // pred_fallthru
          _
        // Predicated region
        $region37: #{autoencoder_forward.1} parent=11 // pred_check
          %p390 = pneg %p200
        $region38: #{autoencoder_forward.1} parent=11 // pred_check_branch
          %392 = sbr.rel (%p390) target = $region40
        $region39: #{autoencoder_forward.1} parent=11 // pred_region
          _
        $region40: #{autoencoder_forward.1} parent=11 // pred_fallthru
          _
        // Predicated region
        $region41: #{autoencoder_forward.1} parent=11 // pred_check
          %p393 = pneg %p221
        $region42: #{autoencoder_forward.1} parent=11 // pred_check_branch
          %395 = sbr.rel (%p393) target = $region44
        $region43: #{autoencoder_forward.1} parent=11 // pred_region
          _
        $region44: #{autoencoder_forward.1} parent=11 // pred_fallthru
          _
        // Predicated region
        $region45: #{autoencoder_forward.1} parent=11 // pred_check
          %p396 = pneg %p242
        $region46: #{autoencoder_forward.1} parent=11 // pred_check_branch
          %398 = sbr.rel (%p396) target = $region48
        $region47: #{autoencoder_forward.1} parent=11 // pred_region
          _
        $region48: #{autoencoder_forward.1} parent=11 // pred_fallthru
          _
        // Predicated region
        $region49: #{autoencoder_forward.1} parent=11 // pred_check
          %p399 = pneg %p263
        $region50: #{autoencoder_forward.1} parent=11 // pred_check_branch
          %401 = sbr.rel (%p399) target = $region52
        $region51: #{autoencoder_forward.1} parent=11 // pred_region
          _
        $region52: #{autoencoder_forward.1} parent=11 // pred_fallthru
          _
        // Predicated region
        $region53: #{autoencoder_forward.1} parent=11 // pred_check
          %p402 = pneg %p284
        $region54: #{autoencoder_forward.1} parent=11 // pred_check_branch
          %404 = sbr.rel (%p402) target = $region56
        $region55: #{autoencoder_forward.1} parent=11 // pred_region
          _
        $region56: #{autoencoder_forward.1} parent=11 // pred_fallthru
          _
        // Predicated region
        $region57: #{autoencoder_forward.1} parent=11 // pred_check
          %p405 = pneg %p305
        $region58: #{autoencoder_forward.1} parent=11 // pred_check_branch
          %407 = sbr.rel (%p405) target = $region60
        $region59: #{autoencoder_forward.1} parent=11 // pred_region
          _
        $region60: #{autoencoder_forward.1} parent=11 // pred_fallthru
          _
      $region12: #{autoencoder_forward.1} parent=5 // pred_fallthru
        _
      %p408 = scmp.lt.s32.totalorder %s27, 2
      // Predicated region
      $region61: #{autoencoder_forward.1} parent=5 // pred_check
        %p409 = pneg %p408
      $region62: #{autoencoder_forward.1} parent=5 // pred_check_branch
        %411 = sbr.rel (%p409) target = $region64
      $region63: #{autoencoder_forward.1} parent=5 // pred_region
        // Predicated region
        $region65: #{autoencoder_forward.1} parent=63 // pred_check
          %p412 = pneg %p47
        $region66: #{autoencoder_forward.1} parent=63 // pred_check_branch
          %414 = sbr.rel (%p412) target = $region68
        $region67: #{autoencoder_forward.1} parent=63 // pred_region
          %p415 = scmp.lt.s32.totalorder %s27, 1
          %s416 = scalar_select %p415, %s27, 1
          %s417 = smul.addr %s416, 8
          %s418 = scalar_lea.vmem %s0, %s417
        $region68: #{autoencoder_forward.1} parent=63 // pred_fallthru
          _
      $region64: #{autoencoder_forward.1} parent=5 // pred_fallthru
        _
      %p419 = scmp.le.s32.totalorder 1, %s27
      %p420 = scmp.lt.s32.totalorder %s27, 3
      %p421 = pnand %p419, %p420
      %p422 = pneg %p421
      // Predicated region
      $region69: #{autoencoder_forward.1} parent=5 // pred_check
        _
      $region70: #{autoencoder_forward.1} parent=5 // pred_check_branch
        %424 = sbr.rel (%p421) target = $region72
      $region71: #{autoencoder_forward.1} parent=5 // pred_region
        %s425 = ssub.s32 %s27, 1
        %p426 = scmp.lt.s32.totalorder %s32, 1
        %s427 = scalar_select %p426, %s32, 1
        %s428 = smul.addr %s427, 8
        %s429 = scalar_lea.vmem %s0, %s428
        %p430 = pneg %p53
        %p431 = pneg %p50
        %p432 = pneg %p74
        %p433 = pneg %p71
        %p434 = pneg %p95
        %p435 = pneg %p92
        %p436 = pneg %p116
        %p437 = pneg %p113
        %p438 = pneg %p137
        %p439 = pneg %p134
        %p440 = pneg %p158
        %p441 = pneg %p155
        %p442 = pneg %p179
        %p443 = pneg %p176
        %p444 = pneg %p200
        %p445 = pneg %p197
        %p446 = pneg %p221
        %p447 = pneg %p218
        %p448 = pneg %p242
        %p449 = pneg %p239
        %p450 = pneg %p263
        %p451 = pneg %p260
        %p452 = pneg %p284
        %p453 = pneg %p281
        %p454 = pneg %p305
        %p455 = pneg %p302
        %p456 = pneg %p331
        %p457 = pneg %p328
        %s458 = sand.u32 %s318, 1
        %s459 = scalar_lea.sflag [#allocation3], %s458
        %s460 = sand.u32 %s318, 1
        %s461 = smul.addr %s460, 8
        %s462 = scalar_lea.vmem [#allocation2], %s461
        %p463 = pneg %p357
        %p464 = pneg %p354
        %s465 = sand.u32 %s344, 1
        %s466 = scalar_lea.sflag [#allocation5], %s465
        %s467 = sand.u32 %s344, 1
        %s468 = smul.addr %s467, 8
        %s469 = scalar_lea.vmem [#allocation4], %s468
        %p470 = scmp.lt.s32.totalorder %s32, 1
        %s471 = scalar_select %p470, %s32, 1
        %s472 = smul.addr %s471, 8
        %s473 = scalar_lea.vmem %s0, %s472
        %v474 = vld [vmem:[%s473] sm:$0xff]
        %v475 = vld [vmem:[%s1] sm:$0xff]
        %v476 = vld [vmem:[%s1 + $0x8] sm:$0xff]
        %v477 = vld [vmem:[%s1 + $0x10] sm:$0xff]
        %v478 = vld [vmem:[%s1 + $0x18] sm:$0xff]
        %v479 = vld [vmem:[%s1 + $0x20] sm:$0xff]
        %v480 = vld [vmem:[%s1 + $0x28] sm:$0xff]
        %v481 = vld [vmem:[%s1 + $0x30] sm:$0xff]
        %v482 = vld [vmem:[%s1 + $0x38] sm:$0xff]
        %v483 = vld [vmem:[%s1 + $0x40] sm:$0xff]
        %v484 = vld [vmem:[%s1 + $0x48] sm:$0xff]
        %v485 = vld [vmem:[%s1 + $0x50] sm:$0xff]
        %v486 = vld [vmem:[%s1 + $0x58] sm:$0xff]
        %v487 = vld [vmem:[%s1 + $0x60] sm:$0xff]
        %v488 = vld [vmem:[%s1 + $0x68] sm:$0xff]
        %v489 = vld [vmem:[%s1 + $0x70] sm:$0xff]
        %v490 = vld [vmem:[%s1 + $0x78] sm:$0xff]
        %v491 = vld [vmem:[%s1 + $0x80] sm:$0xff]
        %v492 = vld [vmem:[%s1 + $0x88] sm:$0xff]
        %v493 = vld [vmem:[%s1 + $0x90] sm:$0xff]
        %v494 = vld [vmem:[%s1 + $0x98] sm:$0xff]
        %v495 = vld [vmem:[%s1 + $0xa0] sm:$0xff]
        %v496 = vld [vmem:[%s1 + $0xa8] sm:$0xff]
        %v497 = vld [vmem:[%s1 + $0xb0] sm:$0xff]
        %v498 = vld [vmem:[%s1 + $0xb8] sm:$0xff]
        %v499 = vld [vmem:[%s1 + $0xc0] sm:$0xff]
        %v500 = vld [vmem:[%s1 + $0xc8] sm:$0xff]
        %v501 = vld [vmem:[%s1 + $0xd0] sm:$0xff]
        %v502 = vld [vmem:[%s1 + $0xd8] sm:$0xff]
        %v503 = vld [vmem:[%s1 + $0xe0] sm:$0xff]
        %v504 = vld [vmem:[%s1 + $0xe8] sm:$0xff]
        %v505 = vld [vmem:[%s1 + $0xf0] sm:$0xff]
        %v506 = vld [vmem:[%s1 + $0xf8] sm:$0xff]
        %v507 = vld [vmem:[%s1 + $0x100] sm:$0xff]
        %v508 = vld [vmem:[%s1 + $0x108] sm:$0xff]
        %v509 = vld [vmem:[%s1 + $0x110] sm:$0xff]
        %v510 = vld [vmem:[%s1 + $0x118] sm:$0xff]
        %v511 = vld [vmem:[%s1 + $0x120] sm:$0xff]
        %v512 = vld [vmem:[%s1 + $0x128] sm:$0xff]
        %v513 = vld [vmem:[%s1 + $0x130] sm:$0xff]
        %v514 = vld [vmem:[%s1 + $0x138] sm:$0xff]
        %v515 = vld [vmem:[%s1 + $0x140] sm:$0xff]
        %v516 = vld [vmem:[%s1 + $0x148] sm:$0xff]
        %v517 = vld [vmem:[%s1 + $0x150] sm:$0xff]
        %v518 = vld [vmem:[%s1 + $0x158] sm:$0xff]
        %v519 = vld [vmem:[%s1 + $0x160] sm:$0xff]
        %v520 = vld [vmem:[%s1 + $0x168] sm:$0xff]
        %v521 = vld [vmem:[%s1 + $0x170] sm:$0xff]
        %v522 = vld [vmem:[%s1 + $0x178] sm:$0xff]
        %v523 = vld [vmem:[%s1 + $0x180] sm:$0xff]
        %v524 = vld [vmem:[%s1 + $0x188] sm:$0xff]
        %v525 = vld [vmem:[%s1 + $0x190] sm:$0xff]
        %v526 = vld [vmem:[%s1 + $0x198] sm:$0xff]
        %v527 = vld [vmem:[%s1 + $0x1a0] sm:$0xff]
        %v528 = vld [vmem:[%s1 + $0x1a8] sm:$0xff]
        %v529 = vld [vmem:[%s1 + $0x1b0] sm:$0xff]
        %v530 = vld [vmem:[%s1 + $0x1b8] sm:$0xff]
        %v531 = vld [vmem:[%s1 + $0x1c0] sm:$0xff]
        %v532 = vld [vmem:[%s1 + $0x1c8] sm:$0xff]
        %v533 = vld [vmem:[%s1 + $0x1d0] sm:$0xff]
        %v534 = vld [vmem:[%s1 + $0x1d8] sm:$0xff]
        %v535 = vld [vmem:[%s1 + $0x1e0] sm:$0xff]
        %v536 = vld [vmem:[%s1 + $0x1e8] sm:$0xff]
        %v537 = vld [vmem:[%s1 + $0x1f0] sm:$0xff]
        %v538 = vld [vmem:[%s1 + $0x1f8] sm:$0xff]
        %v539 = vld [vmem:[%s2] sm:$0xf]
        %v541 = vlaneseq
        %v542 = vshrl.u32 %v541, 7
        %v543 = vsub.s32 0, %v542
        %v544 = vrot.slane %v539, %v543
        %v545 = vlaneseq
        %v546 = vshrl.u32 %v545, 7
        %v547 = vsub.s32 1, %v546
        %v548 = vrot.slane %v539, %v547
        %v549 = vlaneseq
        %v550 = vshrl.u32 %v549, 7
        %v551 = vsub.s32 2, %v550
        %v552 = vrot.slane %v539, %v551
        %v553 = vlaneseq
        %v554 = vshrl.u32 %v553, 7
        %v555 = vsub.s32 3, %v554
        %v556 = vrot.slane %v539, %v555
        %561 = vmatprep.subr.mxu0 %v476
        %562 = vmatpush1.msra.mxu0 %v475
        %563 = vmatprep.subr.mxu0 %v480
        %564 = vmatpush1.msra.mxu0 %v479
        %565 = vmatprep.subr.mxu0 %v484
        %566 = vmatpush1.msra.mxu0 %v483
        %567 = vmatprep.subr.mxu0 %v488
        %568 = vmatpush1.msra.mxu0 %v487
        %569 = vmatprep.subr.mxu0 %v492
        %570 = vmatpush1.msra.mxu0 %v491
        %571 = vmatprep.subr.mxu0 %v496
        %572 = vmatpush1.msra.mxu0 %v495
        %573 = vmatprep.subr.mxu0 %v500
        %574 = vmatpush1.msra.mxu0 %v499
        %575 = vmatprep.subr.mxu0 %v504
        %576 = vmatpush1.msra.mxu0 %v503
        %577 = vmatprep.subr.mxu0 %v508
        %578 = vmatpush1.msra.mxu0 %v507
        %579 = vmatprep.subr.mxu0 %v512
        %580 = vmatpush1.msra.mxu0 %v511
        %581 = vmatprep.subr.mxu0 %v516
        %582 = vmatpush1.msra.mxu0 %v515
        %583 = vmatprep.subr.mxu0 %v520
        %584 = vmatpush1.msra.mxu0 %v519
        %585 = vmatprep.subr.mxu0 %v524
        %586 = vmatpush1.msra.mxu0 %v523
        %587 = vmatprep.subr.mxu0 %v528
        %588 = vmatpush1.msra.mxu0 %v527
        %589 = vmatprep.subr.mxu0 %v532
        %590 = vmatpush1.msra.mxu0 %v531
        %591 = vmatprep.subr.mxu0 %v536
        %592 = vmatpush1.msra.mxu0 %v535
        %593 = vmatprep.subr.mxu0 0.0
        %594 = vmatpush1.msra.mxu0 0.0
        %595 = vmatprep.subr.mxu0 0.0
        %596 = vmatpush1.msra.mxu0 0.0
        %597 = vmatprep.subr.mxu0 0.0
        %598 = vmatpush1.msra.mxu0 0.0
        %599 = vmatprep.subr.mxu0 0.0
        %600 = vmatpush1.msra.mxu0 0.0
        %601 = vmatprep.subr.mxu0 0.0
        %602 = vmatpush1.msra.mxu0 0.0
        %603 = vmatprep.subr.mxu0 0.0
        %604 = vmatpush1.msra.mxu0 0.0
        %605 = vmatprep.subr.mxu0 0.0
        %606 = vmatpush1.msra.mxu0 0.0
        %607 = vmatprep.subr.mxu0 0.0
        %608 = vmatpush1.msra.mxu0 0.0
        %609 = vmatprep.subr.mxu0 0.0
        %610 = vmatpush1.msra.mxu0 0.0
        %611 = vmatprep.subr.mxu0 0.0
        %612 = vmatpush1.msra.mxu0 0.0
        %613 = vmatprep.subr.mxu0 0.0
        %614 = vmatpush1.msra.mxu0 0.0
        %615 = vmatprep.subr.mxu0 0.0
        %616 = vmatpush1.msra.mxu0 0.0
        %617 = vmatprep.subr.mxu0 0.0
        %618 = vmatpush1.msra.mxu0 0.0
        %619 = vmatprep.subr.mxu0 0.0
        %620 = vmatpush1.msra.mxu0 0.0
        %621 = vmatprep.subr.mxu0 0.0
        %622 = vmatpush1.msra.mxu0 0.0
        %623 = vmatprep.subr.mxu0 0.0
        %624 = vmatpush1.msra.mxu0 0.0
        %625 = vmatprep.mubr.f32.mxu0 0.0
        %626 = vmatmul.mubr.f32.gmra.mrb[0].mxu0 %v474
        %v627 = vpop.f32.mrb[0].mxu0
        %v628 = vadd.f32 %v544, %v627
        %v629 = vpop.f32.mrb[0].mxu0
        %v630 = vadd.f32 %v548, %v629
        %631 = vdwg.mxu0
        %632 = vmatprep.subr.mxu0 %v478
        %633 = vmatpush1.msra.mxu0 %v477
        %634 = vmatprep.subr.mxu0 %v482
        %635 = vmatpush1.msra.mxu0 %v481
        %636 = vmatprep.subr.mxu0 %v486
        %637 = vmatpush1.msra.mxu0 %v485
        %638 = vmatprep.subr.mxu0 %v490
        %639 = vmatpush1.msra.mxu0 %v489
        %640 = vmatprep.subr.mxu0 %v494
        %641 = vmatpush1.msra.mxu0 %v493
        %642 = vmatprep.subr.mxu0 %v498
        %643 = vmatpush1.msra.mxu0 %v497
        %644 = vmatprep.subr.mxu0 %v502
        %645 = vmatpush1.msra.mxu0 %v501
        %646 = vmatprep.subr.mxu0 %v506
        %647 = vmatpush1.msra.mxu0 %v505
        %648 = vmatprep.subr.mxu0 %v510
        %649 = vmatpush1.msra.mxu0 %v509
        %650 = vmatprep.subr.mxu0 %v514
        %651 = vmatpush1.msra.mxu0 %v513
        %652 = vmatprep.subr.mxu0 %v518
        %653 = vmatpush1.msra.mxu0 %v517
        %654 = vmatprep.subr.mxu0 %v522
        %655 = vmatpush1.msra.mxu0 %v521
        %656 = vmatprep.subr.mxu0 %v526
        %657 = vmatpush1.msra.mxu0 %v525
        %658 = vmatprep.subr.mxu0 %v530
        %659 = vmatpush1.msra.mxu0 %v529
        %660 = vmatprep.subr.mxu0 %v534
        %661 = vmatpush1.msra.mxu0 %v533
        %662 = vmatprep.subr.mxu0 %v538
        %663 = vmatpush1.msra.mxu0 %v537
        %664 = vmatprep.subr.mxu0 0.0
        %665 = vmatpush1.msra.mxu0 0.0
        %666 = vmatprep.subr.mxu0 0.0
        %667 = vmatpush1.msra.mxu0 0.0
        %668 = vmatprep.subr.mxu0 0.0
        %669 = vmatpush1.msra.mxu0 0.0
        %670 = vmatprep.subr.mxu0 0.0
        %671 = vmatpush1.msra.mxu0 0.0
        %672 = vmatprep.subr.mxu0 0.0
        %673 = vmatpush1.msra.mxu0 0.0
        %674 = vmatprep.subr.mxu0 0.0
        %675 = vmatpush1.msra.mxu0 0.0
        %676 = vmatprep.subr.mxu0 0.0
        %677 = vmatpush1.msra.mxu0 0.0
        %678 = vmatprep.subr.mxu0 0.0
        %679 = vmatpush1.msra.mxu0 0.0
        %680 = vmatprep.subr.mxu0 0.0
        %681 = vmatpush1.msra.mxu0 0.0
        %682 = vmatprep.subr.mxu0 0.0
        %683 = vmatpush1.msra.mxu0 0.0
        %684 = vmatprep.subr.mxu0 0.0
        %685 = vmatpush1.msra.mxu0 0.0
        %686 = vmatprep.subr.mxu0 0.0
        %687 = vmatpush1.msra.mxu0 0.0
        %688 = vmatprep.subr.mxu0 0.0
        %689 = vmatpush1.msra.mxu0 0.0
        %690 = vmatprep.subr.mxu0 0.0
        %691 = vmatpush1.msra.mxu0 0.0
        %692 = vmatprep.subr.mxu0 0.0
        %693 = vmatpush1.msra.mxu0 0.0
        %694 = vmatprep.subr.mxu0 0.0
        %695 = vmatpush1.msra.mxu0 0.0
        %696 = vmatprep.mubr.f32.mxu0 0.0
        %697 = vmatmul.mubr.f32.gmra.mrb[0].mxu0 %v474
        %v698 = vpop.f32.mrb[0].mxu0
        %v699 = vadd.f32 %v552, %v698
        %v700 = vpop.f32.mrb[0].mxu0
        %v701 = vadd.f32 %v556, %v700
        %702 = vdwg.mxu0
        %v703 = vmul.f32 %v628, 0.01
        %v704 = vmul.f32 %v630, 0.01
        %v705 = vmul.f32 %v699, 0.01
        %v706 = vmul.f32 %v701, 0.01
        %v707 = vmax.f32 %v628, %v703
        %v708 = vmax.f32 %v630, %v704
        %v709 = vmax.f32 %v699, %v705
        %v710 = vmax.f32 %v701, %v706
        %v711 = vld [vmem:[%s3] sm:$0xff]
        %v712 = vld [vmem:[%s3 + $0x8] sm:$0xff]
        %v713 = vld [vmem:[%s3 + $0x10] sm:$0xff]
        %v714 = vld [vmem:[%s3 + $0x18] sm:$0xff]
        %v715 = vld [vmem:[%s3 + $0x20] sm:$0xff]
        %v716 = vld [vmem:[%s3 + $0x28] sm:$0xff]
        %v717 = vld [vmem:[%s3 + $0x30] sm:$0xff]
        %v718 = vld [vmem:[%s3 + $0x38] sm:$0xff]
        %v719 = vld [vmem:[%s3 + $0x40] sm:$0xff]
        %v720 = vld [vmem:[%s3 + $0x48] sm:$0xff]
        %v721 = vld [vmem:[%s3 + $0x50] sm:$0xff]
        %v722 = vld [vmem:[%s3 + $0x58] sm:$0xff]
        %v723 = vld [vmem:[%s3 + $0x60] sm:$0xff]
        %v724 = vld [vmem:[%s3 + $0x68] sm:$0xff]
        %v725 = vld [vmem:[%s3 + $0x70] sm:$0xff]
        %v726 = vld [vmem:[%s3 + $0x78] sm:$0xff]
        %v727 = vld [vmem:[%s3 + $0x80] sm:$0xff]
        %v728 = vld [vmem:[%s3 + $0x88] sm:$0xff]
        %v729 = vld [vmem:[%s3 + $0x90] sm:$0xff]
        %v730 = vld [vmem:[%s3 + $0x98] sm:$0xff]
        %v731 = vld [vmem:[%s3 + $0xa0] sm:$0xff]
        %v732 = vld [vmem:[%s3 + $0xa8] sm:$0xff]
        %v733 = vld [vmem:[%s3 + $0xb0] sm:$0xff]
        %v734 = vld [vmem:[%s3 + $0xb8] sm:$0xff]
        %v735 = vld [vmem:[%s3 + $0xc0] sm:$0xff]
        %v736 = vld [vmem:[%s3 + $0xc8] sm:$0xff]
        %v737 = vld [vmem:[%s3 + $0xd0] sm:$0xff]
        %v738 = vld [vmem:[%s3 + $0xd8] sm:$0xff]
        %v739 = vld [vmem:[%s3 + $0xe0] sm:$0xff]
        %v740 = vld [vmem:[%s3 + $0xe8] sm:$0xff]
        %v741 = vld [vmem:[%s3 + $0xf0] sm:$0xff]
        %v742 = vld [vmem:[%s3 + $0xf8] sm:$0xff]
        %v743 = vld [vmem:[%s3 + $0x100] sm:$0xff]
        %v744 = vld [vmem:[%s3 + $0x108] sm:$0xff]
        %v745 = vld [vmem:[%s3 + $0x110] sm:$0xff]
        %v746 = vld [vmem:[%s3 + $0x118] sm:$0xff]
        %v747 = vld [vmem:[%s3 + $0x120] sm:$0xff]
        %v748 = vld [vmem:[%s3 + $0x128] sm:$0xff]
        %v749 = vld [vmem:[%s3 + $0x130] sm:$0xff]
        %v750 = vld [vmem:[%s3 + $0x138] sm:$0xff]
        %v751 = vld [vmem:[%s3 + $0x140] sm:$0xff]
        %v752 = vld [vmem:[%s3 + $0x148] sm:$0xff]
        %v753 = vld [vmem:[%s3 + $0x150] sm:$0xff]
        %v754 = vld [vmem:[%s3 + $0x158] sm:$0xff]
        %v755 = vld [vmem:[%s3 + $0x160] sm:$0xff]
        %v756 = vld [vmem:[%s3 + $0x168] sm:$0xff]
        %v757 = vld [vmem:[%s3 + $0x170] sm:$0xff]
        %v758 = vld [vmem:[%s3 + $0x178] sm:$0xff]
        %v759 = vld [vmem:[%s3 + $0x180] sm:$0xff]
        %v760 = vld [vmem:[%s3 + $0x188] sm:$0xff]
        %v761 = vld [vmem:[%s3 + $0x190] sm:$0xff]
        %v762 = vld [vmem:[%s3 + $0x198] sm:$0xff]
        %v763 = vld [vmem:[%s3 + $0x1a0] sm:$0xff]
        %v764 = vld [vmem:[%s3 + $0x1a8] sm:$0xff]
        %v765 = vld [vmem:[%s3 + $0x1b0] sm:$0xff]
        %v766 = vld [vmem:[%s3 + $0x1b8] sm:$0xff]
        %v767 = vld [vmem:[%s3 + $0x1c0] sm:$0xff]
        %v768 = vld [vmem:[%s3 + $0x1c8] sm:$0xff]
        %v769 = vld [vmem:[%s3 + $0x1d0] sm:$0xff]
        %v770 = vld [vmem:[%s3 + $0x1d8] sm:$0xff]
        %v771 = vld [vmem:[%s3 + $0x1e0] sm:$0xff]
        %v772 = vld [vmem:[%s3 + $0x1e8] sm:$0xff]
        %v773 = vld [vmem:[%s3 + $0x1f0] sm:$0xff]
        %v774 = vld [vmem:[%s3 + $0x1f8] sm:$0xff]
        %v775 = vld [vmem:[%s3 + $0x200] sm:$0xff]
        %v776 = vld [vmem:[%s3 + $0x208] sm:$0xff]
        %v777 = vld [vmem:[%s3 + $0x210] sm:$0xff]
        %v778 = vld [vmem:[%s3 + $0x218] sm:$0xff]
        %v779 = vld [vmem:[%s3 + $0x220] sm:$0xff]
        %v780 = vld [vmem:[%s3 + $0x228] sm:$0xff]
        %v781 = vld [vmem:[%s3 + $0x230] sm:$0xff]
        %v782 = vld [vmem:[%s3 + $0x238] sm:$0xff]
        %v783 = vld [vmem:[%s3 + $0x240] sm:$0xff]
        %v784 = vld [vmem:[%s3 + $0x248] sm:$0xff]
        %v785 = vld [vmem:[%s3 + $0x250] sm:$0xff]
        %v786 = vld [vmem:[%s3 + $0x258] sm:$0xff]
        %v787 = vld [vmem:[%s3 + $0x260] sm:$0xff]
        %v788 = vld [vmem:[%s3 + $0x268] sm:$0xff]
        %v789 = vld [vmem:[%s3 + $0x270] sm:$0xff]
        %v790 = vld [vmem:[%s3 + $0x278] sm:$0xff]
        %v791 = vld [vmem:[%s3 + $0x280] sm:$0xff]
        %v792 = vld [vmem:[%s3 + $0x288] sm:$0xff]
        %v793 = vld [vmem:[%s3 + $0x290] sm:$0xff]
        %v794 = vld [vmem:[%s3 + $0x298] sm:$0xff]
        %v795 = vld [vmem:[%s3 + $0x2a0] sm:$0xff]
        %v796 = vld [vmem:[%s3 + $0x2a8] sm:$0xff]
        %v797 = vld [vmem:[%s3 + $0x2b0] sm:$0xff]
        %v798 = vld [vmem:[%s3 + $0x2b8] sm:$0xff]
        %v799 = vld [vmem:[%s3 + $0x2c0] sm:$0xff]
        %v800 = vld [vmem:[%s3 + $0x2c8] sm:$0xff]
        %v801 = vld [vmem:[%s3 + $0x2d0] sm:$0xff]
        %v802 = vld [vmem:[%s3 + $0x2d8] sm:$0xff]
        %v803 = vld [vmem:[%s3 + $0x2e0] sm:$0xff]
        %v804 = vld [vmem:[%s3 + $0x2e8] sm:$0xff]
        %v805 = vld [vmem:[%s3 + $0x2f0] sm:$0xff]
        %v806 = vld [vmem:[%s3 + $0x2f8] sm:$0xff]
        %v807 = vld [vmem:[%s3 + $0x300] sm:$0xff]
        %v808 = vld [vmem:[%s3 + $0x308] sm:$0xff]
        %v809 = vld [vmem:[%s3 + $0x310] sm:$0xff]
        %v810 = vld [vmem:[%s3 + $0x318] sm:$0xff]
        %v811 = vld [vmem:[%s3 + $0x320] sm:$0xff]
        %v812 = vld [vmem:[%s3 + $0x328] sm:$0xff]
        %v813 = vld [vmem:[%s3 + $0x330] sm:$0xff]
        %v814 = vld [vmem:[%s3 + $0x338] sm:$0xff]
        %v815 = vld [vmem:[%s3 + $0x340] sm:$0xff]
        %v816 = vld [vmem:[%s3 + $0x348] sm:$0xff]
        %v817 = vld [vmem:[%s3 + $0x350] sm:$0xff]
        %v818 = vld [vmem:[%s3 + $0x358] sm:$0xff]
        %v819 = vld [vmem:[%s3 + $0x360] sm:$0xff]
        %v820 = vld [vmem:[%s3 + $0x368] sm:$0xff]
        %v821 = vld [vmem:[%s3 + $0x370] sm:$0xff]
        %v822 = vld [vmem:[%s3 + $0x378] sm:$0xff]
        %v823 = vld [vmem:[%s3 + $0x380] sm:$0xff]
        %v824 = vld [vmem:[%s3 + $0x388] sm:$0xff]
        %v825 = vld [vmem:[%s3 + $0x390] sm:$0xff]
        %v826 = vld [vmem:[%s3 + $0x398] sm:$0xff]
        %v827 = vld [vmem:[%s3 + $0x3a0] sm:$0xff]
        %v828 = vld [vmem:[%s3 + $0x3a8] sm:$0xff]
        %v829 = vld [vmem:[%s3 + $0x3b0] sm:$0xff]
        %v830 = vld [vmem:[%s3 + $0x3b8] sm:$0xff]
        %v831 = vld [vmem:[%s3 + $0x3c0] sm:$0xff]
        %v832 = vld [vmem:[%s3 + $0x3c8] sm:$0xff]
        %v833 = vld [vmem:[%s3 + $0x3d0] sm:$0xff]
        %v834 = vld [vmem:[%s3 + $0x3d8] sm:$0xff]
        %v835 = vld [vmem:[%s3 + $0x3e0] sm:$0xff]
        %v836 = vld [vmem:[%s3 + $0x3e8] sm:$0xff]
        %v837 = vld [vmem:[%s3 + $0x3f0] sm:$0xff]
        %v838 = vld [vmem:[%s3 + $0x3f8] sm:$0xff]
        %v839 = vld [vmem:[%s3 + $0x400] sm:$0xff]
        %v840 = vld [vmem:[%s3 + $0x408] sm:$0xff]
        %v841 = vld [vmem:[%s3 + $0x410] sm:$0xff]
        %v842 = vld [vmem:[%s3 + $0x418] sm:$0xff]
        %v843 = vld [vmem:[%s3 + $0x420] sm:$0xff]
        %v844 = vld [vmem:[%s3 + $0x428] sm:$0xff]
        %v845 = vld [vmem:[%s3 + $0x430] sm:$0xff]
        %v846 = vld [vmem:[%s3 + $0x438] sm:$0xff]
        %v847 = vld [vmem:[%s3 + $0x440] sm:$0xff]
        %v848 = vld [vmem:[%s3 + $0x448] sm:$0xff]
        %v849 = vld [vmem:[%s3 + $0x450] sm:$0xff]
        %v850 = vld [vmem:[%s3 + $0x458] sm:$0xff]
        %v851 = vld [vmem:[%s3 + $0x460] sm:$0xff]
        %v852 = vld [vmem:[%s3 + $0x468] sm:$0xff]
        %v853 = vld [vmem:[%s3 + $0x470] sm:$0xff]
        %v854 = vld [vmem:[%s3 + $0x478] sm:$0xff]
        %v855 = vld [vmem:[%s3 + $0x480] sm:$0xff]
        %v856 = vld [vmem:[%s3 + $0x488] sm:$0xff]
        %v857 = vld [vmem:[%s3 + $0x490] sm:$0xff]
        %v858 = vld [vmem:[%s3 + $0x498] sm:$0xff]
        %v859 = vld [vmem:[%s3 + $0x4a0] sm:$0xff]
        %v860 = vld [vmem:[%s3 + $0x4a8] sm:$0xff]
        %v861 = vld [vmem:[%s3 + $0x4b0] sm:$0xff]
        %v862 = vld [vmem:[%s3 + $0x4b8] sm:$0xff]
        %v863 = vld [vmem:[%s3 + $0x4c0] sm:$0xff]
        %v864 = vld [vmem:[%s3 + $0x4c8] sm:$0xff]
        %v865 = vld [vmem:[%s3 + $0x4d0] sm:$0xff]
        %v866 = vld [vmem:[%s3 + $0x4d8] sm:$0xff]
        %v867 = vld [vmem:[%s3 + $0x4e0] sm:$0xff]
        %v868 = vld [vmem:[%s3 + $0x4e8] sm:$0xff]
        %v869 = vld [vmem:[%s3 + $0x4f0] sm:$0xff]
        %v870 = vld [vmem:[%s3 + $0x4f8] sm:$0xff]
        %v871 = vld [vmem:[%s3 + $0x500] sm:$0xff]
        %v872 = vld [vmem:[%s3 + $0x508] sm:$0xff]
        %v873 = vld [vmem:[%s3 + $0x510] sm:$0xff]
        %v874 = vld [vmem:[%s3 + $0x518] sm:$0xff]
        %v875 = vld [vmem:[%s3 + $0x520] sm:$0xff]
        %v876 = vld [vmem:[%s3 + $0x528] sm:$0xff]
        %v877 = vld [vmem:[%s3 + $0x530] sm:$0xff]
        %v878 = vld [vmem:[%s3 + $0x538] sm:$0xff]
        %v879 = vld [vmem:[%s3 + $0x540] sm:$0xff]
        %v880 = vld [vmem:[%s3 + $0x548] sm:$0xff]
        %v881 = vld [vmem:[%s3 + $0x550] sm:$0xff]
        %v882 = vld [vmem:[%s3 + $0x558] sm:$0xff]
        %v883 = vld [vmem:[%s3 + $0x560] sm:$0xff]
        %v884 = vld [vmem:[%s3 + $0x568] sm:$0xff]
        %v885 = vld [vmem:[%s3 + $0x570] sm:$0xff]
        %v886 = vld [vmem:[%s3 + $0x578] sm:$0xff]
        %v887 = vld [vmem:[%s3 + $0x580] sm:$0xff]
        %v888 = vld [vmem:[%s3 + $0x588] sm:$0xff]
        %v889 = vld [vmem:[%s3 + $0x590] sm:$0xff]
        %v890 = vld [vmem:[%s3 + $0x598] sm:$0xff]
        %v891 = vld [vmem:[%s3 + $0x5a0] sm:$0xff]
        %v892 = vld [vmem:[%s3 + $0x5a8] sm:$0xff]
        %v893 = vld [vmem:[%s3 + $0x5b0] sm:$0xff]
        %v894 = vld [vmem:[%s3 + $0x5b8] sm:$0xff]
        %v895 = vld [vmem:[%s3 + $0x5c0] sm:$0xff]
        %v896 = vld [vmem:[%s3 + $0x5c8] sm:$0xff]
        %v897 = vld [vmem:[%s3 + $0x5d0] sm:$0xff]
        %v898 = vld [vmem:[%s3 + $0x5d8] sm:$0xff]
        %v899 = vld [vmem:[%s3 + $0x5e0] sm:$0xff]
        %v900 = vld [vmem:[%s3 + $0x5e8] sm:$0xff]
        %v901 = vld [vmem:[%s3 + $0x5f0] sm:$0xff]
        %v902 = vld [vmem:[%s3 + $0x5f8] sm:$0xff]
        %v903 = vld [vmem:[%s4] sm:$0x7]
        %v905 = vlaneseq
        %v906 = vshrl.u32 %v905, 7
        %v907 = vsub.s32 0, %v906
        %v908 = vrot.slane %v903, %v907
        %v909 = vlaneseq
        %v910 = vshrl.u32 %v909, 7
        %v911 = vsub.s32 1, %v910
        %v912 = vrot.slane %v903, %v911
        %v913 = vlaneseq
        %v914 = vshrl.u32 %v913, 7
        %v915 = vsub.s32 2, %v914
        %v916 = vrot.slane %v903, %v915
        %920 = vmatprep.subr.mxu0 %v712
        %921 = vmatpush1.msra.mxu0 %v711
        %922 = vmatprep.subr.mxu0 %v715
        %923 = vmatpush1.msra.mxu0 %v714
        %924 = vmatprep.subr.mxu0 %v718
        %925 = vmatpush1.msra.mxu0 %v717
        %926 = vmatprep.subr.mxu0 %v721
        %927 = vmatpush1.msra.mxu0 %v720
        %928 = vmatprep.subr.mxu0 %v724
        %929 = vmatpush1.msra.mxu0 %v723
        %930 = vmatprep.subr.mxu0 %v727
        %931 = vmatpush1.msra.mxu0 %v726
        %932 = vmatprep.subr.mxu0 %v730
        %933 = vmatpush1.msra.mxu0 %v729
        %934 = vmatprep.subr.mxu0 %v733
        %935 = vmatpush1.msra.mxu0 %v732
        %936 = vmatprep.subr.mxu0 %v736
        %937 = vmatpush1.msra.mxu0 %v735
        %938 = vmatprep.subr.mxu0 %v739
        %939 = vmatpush1.msra.mxu0 %v738
        %940 = vmatprep.subr.mxu0 %v742
        %941 = vmatpush1.msra.mxu0 %v741
        %942 = vmatprep.subr.mxu0 %v745
        %943 = vmatpush1.msra.mxu0 %v744
        %944 = vmatprep.subr.mxu0 %v748
        %945 = vmatpush1.msra.mxu0 %v747
        %946 = vmatprep.subr.mxu0 %v751
        %947 = vmatpush1.msra.mxu0 %v750
        %948 = vmatprep.subr.mxu0 %v754
        %949 = vmatpush1.msra.mxu0 %v753
        %950 = vmatprep.subr.mxu0 %v757
        %951 = vmatpush1.msra.mxu0 %v756
        %952 = vmatprep.subr.mxu0 %v760
        %953 = vmatpush1.msra.mxu0 %v759
        %954 = vmatprep.subr.mxu0 %v763
        %955 = vmatpush1.msra.mxu0 %v762
        %956 = vmatprep.subr.mxu0 %v766
        %957 = vmatpush1.msra.mxu0 %v765
        %958 = vmatprep.subr.mxu0 %v769
        %959 = vmatpush1.msra.mxu0 %v768
        %960 = vmatprep.subr.mxu0 %v772
        %961 = vmatpush1.msra.mxu0 %v771
        %962 = vmatprep.subr.mxu0 %v775
        %963 = vmatpush1.msra.mxu0 %v774
        %964 = vmatprep.subr.mxu0 %v778
        %965 = vmatpush1.msra.mxu0 %v777
        %966 = vmatprep.subr.mxu0 %v781
        %967 = vmatpush1.msra.mxu0 %v780
        %968 = vmatprep.subr.mxu0 %v784
        %969 = vmatpush1.msra.mxu0 %v783
        %970 = vmatprep.subr.mxu0 %v787
        %971 = vmatpush1.msra.mxu0 %v786
        %972 = vmatprep.subr.mxu0 %v790
        %973 = vmatpush1.msra.mxu0 %v789
        %974 = vmatprep.subr.mxu0 %v793
        %975 = vmatpush1.msra.mxu0 %v792
        %976 = vmatprep.subr.mxu0 %v796
        %977 = vmatpush1.msra.mxu0 %v795
        %978 = vmatprep.subr.mxu0 %v799
        %979 = vmatpush1.msra.mxu0 %v798
        %980 = vmatprep.subr.mxu0 %v802
        %981 = vmatpush1.msra.mxu0 %v801
        %982 = vmatprep.subr.mxu0 %v805
        %983 = vmatpush1.msra.mxu0 %v804
        %984 = vmatprep.mubr.f32.mxu0 %v708
        %985 = vmatmul.mubr.f32.gmra.mrb[0].mxu0 %v707
        %v986 = vpop.f32.mrb[0].mxu0
        %v987 = vadd.f32 %v908, %v986
        %v988 = vpop.f32.mrb[0].mxu0
        %v989 = vadd.f32 %v912, %v988
        %990 = vdwg.mxu0
        %991 = vmatprep.subr.mxu0 %v808
        %992 = vmatpush1.msra.mxu0 %v807
        %993 = vmatprep.subr.mxu0 %v811
        %994 = vmatpush1.msra.mxu0 %v810
        %995 = vmatprep.subr.mxu0 %v814
        %996 = vmatpush1.msra.mxu0 %v813
        %997 = vmatprep.subr.mxu0 %v817
        %998 = vmatpush1.msra.mxu0 %v816
        %999 = vmatprep.subr.mxu0 %v820
        %1000 = vmatpush1.msra.mxu0 %v819
        %1001 = vmatprep.subr.mxu0 %v823
        %1002 = vmatpush1.msra.mxu0 %v822
        %1003 = vmatprep.subr.mxu0 %v826
        %1004 = vmatpush1.msra.mxu0 %v825
        %1005 = vmatprep.subr.mxu0 %v829
        %1006 = vmatpush1.msra.mxu0 %v828
        %1007 = vmatprep.subr.mxu0 %v832
        %1008 = vmatpush1.msra.mxu0 %v831
        %1009 = vmatprep.subr.mxu0 %v835
        %1010 = vmatpush1.msra.mxu0 %v834
        %1011 = vmatprep.subr.mxu0 %v838
        %1012 = vmatpush1.msra.mxu0 %v837
        %1013 = vmatprep.subr.mxu0 %v841
        %1014 = vmatpush1.msra.mxu0 %v840
        %1015 = vmatprep.subr.mxu0 %v844
        %1016 = vmatpush1.msra.mxu0 %v843
        %1017 = vmatprep.subr.mxu0 %v847
        %1018 = vmatpush1.msra.mxu0 %v846
        %1019 = vmatprep.subr.mxu0 %v850
        %1020 = vmatpush1.msra.mxu0 %v849
        %1021 = vmatprep.subr.mxu0 %v853
        %1022 = vmatpush1.msra.mxu0 %v852
        %1023 = vmatprep.subr.mxu0 %v856
        %1024 = vmatpush1.msra.mxu0 %v855
        %1025 = vmatprep.subr.mxu0 %v859
        %1026 = vmatpush1.msra.mxu0 %v858
        %1027 = vmatprep.subr.mxu0 %v862
        %1028 = vmatpush1.msra.mxu0 %v861
        %1029 = vmatprep.subr.mxu0 %v865
        %1030 = vmatpush1.msra.mxu0 %v864
        %1031 = vmatprep.subr.mxu0 %v868
        %1032 = vmatpush1.msra.mxu0 %v867
        %1033 = vmatprep.subr.mxu0 %v871
        %1034 = vmatpush1.msra.mxu0 %v870
        %1035 = vmatprep.subr.mxu0 %v874
        %1036 = vmatpush1.msra.mxu0 %v873
        %1037 = vmatprep.subr.mxu0 %v877
        %1038 = vmatpush1.msra.mxu0 %v876
        %1039 = vmatprep.subr.mxu0 %v880
        %1040 = vmatpush1.msra.mxu0 %v879
        %1041 = vmatprep.subr.mxu0 %v883
        %1042 = vmatpush1.msra.mxu0 %v882
        %1043 = vmatprep.subr.mxu0 %v886
        %1044 = vmatpush1.msra.mxu0 %v885
        %1045 = vmatprep.subr.mxu0 %v889
        %1046 = vmatpush1.msra.mxu0 %v888
        %1047 = vmatprep.subr.mxu0 %v892
        %1048 = vmatpush1.msra.mxu0 %v891
        %1049 = vmatprep.subr.mxu0 %v895
        %1050 = vmatpush1.msra.mxu0 %v894
        %1051 = vmatprep.subr.mxu0 %v898
        %1052 = vmatpush1.msra.mxu0 %v897
        %1053 = vmatprep.subr.mxu0 %v901
        %1054 = vmatpush1.msra.mxu0 %v900
        %1055 = vmatprep.mubr.f32.mxu0 %v710
        %1056 = vmatmul.mubr.f32.gmra.mrb[0].mxu0 %v709
        %v1057 = vpop.f32.mrb[0].mxu0
        %v1058 = vadd.f32 %v987, %v1057
        %v1059 = vpop.f32.mrb[0].mxu0
        %v1060 = vadd.f32 %v989, %v1059
        %1061 = vdwg.mxu0
        %1062 = vmatprep.subr.mxu0 0.0
        %1063 = vmatpush1.msra.mxu0 %v713
        %1064 = vmatprep.subr.mxu0 0.0
        %1065 = vmatpush1.msra.mxu0 %v716
        %1066 = vmatprep.subr.mxu0 0.0
        %1067 = vmatpush1.msra.mxu0 %v719
        %1068 = vmatprep.subr.mxu0 0.0
        %1069 = vmatpush1.msra.mxu0 %v722
        %1070 = vmatprep.subr.mxu0 0.0
        %1071 = vmatpush1.msra.mxu0 %v725
        %1072 = vmatprep.subr.mxu0 0.0
        %1073 = vmatpush1.msra.mxu0 %v728
        %1074 = vmatprep.subr.mxu0 0.0
        %1075 = vmatpush1.msra.mxu0 %v731
        %1076 = vmatprep.subr.mxu0 0.0
        %1077 = vmatpush1.msra.mxu0 %v734
        %1078 = vmatprep.subr.mxu0 0.0
        %1079 = vmatpush1.msra.mxu0 %v737
        %1080 = vmatprep.subr.mxu0 0.0
        %1081 = vmatpush1.msra.mxu0 %v740
        %1082 = vmatprep.subr.mxu0 0.0
        %1083 = vmatpush1.msra.mxu0 %v743
        %1084 = vmatprep.subr.mxu0 0.0
        %1085 = vmatpush1.msra.mxu0 %v746
        %1086 = vmatprep.subr.mxu0 0.0
        %1087 = vmatpush1.msra.mxu0 %v749
        %1088 = vmatprep.subr.mxu0 0.0
        %1089 = vmatpush1.msra.mxu0 %v752
        %1090 = vmatprep.subr.mxu0 0.0
        %1091 = vmatpush1.msra.mxu0 %v755
        %1092 = vmatprep.subr.mxu0 0.0
        %1093 = vmatpush1.msra.mxu0 %v758
        %1094 = vmatprep.subr.mxu0 0.0
        %1095 = vmatpush1.msra.mxu0 %v761
        %1096 = vmatprep.subr.mxu0 0.0
        %1097 = vmatpush1.msra.mxu0 %v764
        %1098 = vmatprep.subr.mxu0 0.0
        %1099 = vmatpush1.msra.mxu0 %v767
        %1100 = vmatprep.subr.mxu0 0.0
        %1101 = vmatpush1.msra.mxu0 %v770
        %1102 = vmatprep.subr.mxu0 0.0
        %1103 = vmatpush1.msra.mxu0 %v773
        %1104 = vmatprep.subr.mxu0 0.0
        %1105 = vmatpush1.msra.mxu0 %v776
        %1106 = vmatprep.subr.mxu0 0.0
        %1107 = vmatpush1.msra.mxu0 %v779
        %1108 = vmatprep.subr.mxu0 0.0
        %1109 = vmatpush1.msra.mxu0 %v782
        %1110 = vmatprep.subr.mxu0 0.0
        %1111 = vmatpush1.msra.mxu0 %v785
        %1112 = vmatprep.subr.mxu0 0.0
        %1113 = vmatpush1.msra.mxu0 %v788
        %1114 = vmatprep.subr.mxu0 0.0
        %1115 = vmatpush1.msra.mxu0 %v791
        %1116 = vmatprep.subr.mxu0 0.0
        %1117 = vmatpush1.msra.mxu0 %v794
        %1118 = vmatprep.subr.mxu0 0.0
        %1119 = vmatpush1.msra.mxu0 %v797
        %1120 = vmatprep.subr.mxu0 0.0
        %1121 = vmatpush1.msra.mxu0 %v800
        %1122 = vmatprep.subr.mxu0 0.0
        %1123 = vmatpush1.msra.mxu0 %v803
        %1124 = vmatprep.subr.mxu0 0.0
        %1125 = vmatpush1.msra.mxu0 %v806
        %1126 = vmatprep.mubr.f32.mxu0 %v708
        %1127 = vmatmul.mubr.f32.gmra.mrb[0].mxu0 %v707
        %v1128 = vpop.f32.mrb[0].mxu0
        %v1129 = vadd.f32 %v916, %v1128
        %v1130 = vpop.f32.mrb[0].mxu0
        %1131 = vdwg.mxu0
        %1132 = vmatprep.subr.mxu0 0.0
        %1133 = vmatpush1.msra.mxu0 %v809
        %1134 = vmatprep.subr.mxu0 0.0
        %1135 = vmatpush1.msra.mxu0 %v812
        %1136 = vmatprep.subr.mxu0 0.0
        %1137 = vmatpush1.msra.mxu0 %v815
        %1138 = vmatprep.subr.mxu0 0.0
        %1139 = vmatpush1.msra.mxu0 %v818
        %1140 = vmatprep.subr.mxu0 0.0
        %1141 = vmatpush1.msra.mxu0 %v821
        %1142 = vmatprep.subr.mxu0 0.0
        %1143 = vmatpush1.msra.mxu0 %v824
        %1144 = vmatprep.subr.mxu0 0.0
        %1145 = vmatpush1.msra.mxu0 %v827
        %1146 = vmatprep.subr.mxu0 0.0
        %1147 = vmatpush1.msra.mxu0 %v830
        %1148 = vmatprep.subr.mxu0 0.0
        %1149 = vmatpush1.msra.mxu0 %v833
        %1150 = vmatprep.subr.mxu0 0.0
        %1151 = vmatpush1.msra.mxu0 %v836
        %1152 = vmatprep.subr.mxu0 0.0
        %1153 = vmatpush1.msra.mxu0 %v839
        %1154 = vmatprep.subr.mxu0 0.0
        %1155 = vmatpush1.msra.mxu0 %v842
        %1156 = vmatprep.subr.mxu0 0.0
        %1157 = vmatpush1.msra.mxu0 %v845
        %1158 = vmatprep.subr.mxu0 0.0
        %1159 = vmatpush1.msra.mxu0 %v848
        %1160 = vmatprep.subr.mxu0 0.0
        %1161 = vmatpush1.msra.mxu0 %v851
        %1162 = vmatprep.subr.mxu0 0.0
        %1163 = vmatpush1.msra.mxu0 %v854
        %1164 = vmatprep.subr.mxu0 0.0
        %1165 = vmatpush1.msra.mxu0 %v857
        %1166 = vmatprep.subr.mxu0 0.0
        %1167 = vmatpush1.msra.mxu0 %v860
        %1168 = vmatprep.subr.mxu0 0.0
        %1169 = vmatpush1.msra.mxu0 %v863
        %1170 = vmatprep.subr.mxu0 0.0
        %1171 = vmatpush1.msra.mxu0 %v866
        %1172 = vmatprep.subr.mxu0 0.0
        %1173 = vmatpush1.msra.mxu0 %v869
        %1174 = vmatprep.subr.mxu0 0.0
        %1175 = vmatpush1.msra.mxu0 %v872
        %1176 = vmatprep.subr.mxu0 0.0
        %1177 = vmatpush1.msra.mxu0 %v875
        %1178 = vmatprep.subr.mxu0 0.0
        %1179 = vmatpush1.msra.mxu0 %v878
        %1180 = vmatprep.subr.mxu0 0.0
        %1181 = vmatpush1.msra.mxu0 %v881
        %1182 = vmatprep.subr.mxu0 0.0
        %1183 = vmatpush1.msra.mxu0 %v884
        %1184 = vmatprep.subr.mxu0 0.0
        %1185 = vmatpush1.msra.mxu0 %v887
        %1186 = vmatprep.subr.mxu0 0.0
        %1187 = vmatpush1.msra.mxu0 %v890
        %1188 = vmatprep.subr.mxu0 0.0
        %1189 = vmatpush1.msra.mxu0 %v893
        %1190 = vmatprep.subr.mxu0 0.0
        %1191 = vmatpush1.msra.mxu0 %v896
        %1192 = vmatprep.subr.mxu0 0.0
        %1193 = vmatpush1.msra.mxu0 %v899
        %1194 = vmatprep.subr.mxu0 0.0
        %1195 = vmatpush1.msra.mxu0 %v902
        %1196 = vmatprep.mubr.f32.mxu0 %v710
        %1197 = vmatmul.mubr.f32.gmra.mrb[0].mxu0 %v709
        %v1198 = vpop.f32.mrb[0].mxu0
        %v1199 = vadd.f32 %v1129, %v1198
        %v1200 = vpop.f32.mrb[0].mxu0
        %1201 = vdwg.mxu0
        %v1202 = vmul.f32 %v1058, 0.01
        %v1203 = vmul.f32 %v1060, 0.01
        %v1204 = vmul.f32 %v1199, 0.01
        %v1205 = vmax.f32 %v1058, %v1202
        %v1206 = vmax.f32 %v1060, %v1203
        %v1207 = vmax.f32 %v1199, %v1204
        %v1208 = vld [vmem:[%s5] sm:$0xff]
        %v1209 = vld [vmem:[%s5 + $0x8] sm:$0xff]
        %v1210 = vld [vmem:[%s5 + $0x10] sm:$0xff]
        %v1211 = vld [vmem:[%s5 + $0x18] sm:$0xff]
        %v1212 = vld [vmem:[%s5 + $0x20] sm:$0xff]
        %v1213 = vld [vmem:[%s5 + $0x28] sm:$0xff]
        %v1214 = vld [vmem:[%s5 + $0x30] sm:$0xff]
        %v1215 = vld [vmem:[%s5 + $0x38] sm:$0xff]
        %v1216 = vld [vmem:[%s5 + $0x40] sm:$0xff]
        %v1217 = vld [vmem:[%s5 + $0x48] sm:$0xff]
        %v1218 = vld [vmem:[%s5 + $0x50] sm:$0xff]
        %v1219 = vld [vmem:[%s5 + $0x58] sm:$0xff]
        %v1220 = vld [vmem:[%s5 + $0x60] sm:$0xff]
        %v1221 = vld [vmem:[%s5 + $0x68] sm:$0xff]
        %v1222 = vld [vmem:[%s5 + $0x70] sm:$0xff]
        %v1223 = vld [vmem:[%s5 + $0x78] sm:$0xff]
        %v1224 = vld [vmem:[%s5 + $0x80] sm:$0xff]
        %v1225 = vld [vmem:[%s5 + $0x88] sm:$0xff]
        %v1226 = vld [vmem:[%s5 + $0x90] sm:$0xff]
        %v1227 = vld [vmem:[%s5 + $0x98] sm:$0xff]
        %v1228 = vld [vmem:[%s5 + $0xa0] sm:$0xff]
        %v1229 = vld [vmem:[%s5 + $0xa8] sm:$0xff]
        %v1230 = vld [vmem:[%s5 + $0xb0] sm:$0xff]
        %v1231 = vld [vmem:[%s5 + $0xb8] sm:$0xff]
        %v1232 = vld [vmem:[%s5 + $0xc0] sm:$0xff]
        %v1233 = vld [vmem:[%s5 + $0xc8] sm:$0xff]
        %v1234 = vld [vmem:[%s5 + $0xd0] sm:$0xff]
        %v1235 = vld [vmem:[%s5 + $0xd8] sm:$0xff]
        %v1236 = vld [vmem:[%s5 + $0xe0] sm:$0xff]
        %v1237 = vld [vmem:[%s5 + $0xe8] sm:$0xff]
        %v1238 = vld [vmem:[%s5 + $0xf0] sm:$0xff]
        %v1239 = vld [vmem:[%s5 + $0xf8] sm:$0xff]
        %v1240 = vld [vmem:[%s5 + $0x100] sm:$0xff]
        %v1241 = vld [vmem:[%s5 + $0x108] sm:$0xff]
        %v1242 = vld [vmem:[%s5 + $0x110] sm:$0xff]
        %v1243 = vld [vmem:[%s5 + $0x118] sm:$0xff]
        %v1244 = vld [vmem:[%s5 + $0x120] sm:$0xff]
        %v1245 = vld [vmem:[%s5 + $0x128] sm:$0xff]
        %v1246 = vld [vmem:[%s5 + $0x130] sm:$0xff]
        %v1247 = vld [vmem:[%s5 + $0x138] sm:$0xff]
        %v1248 = vld [vmem:[%s5 + $0x140] sm:$0xff]
        %v1249 = vld [vmem:[%s5 + $0x148] sm:$0xff]
        %v1250 = vld [vmem:[%s5 + $0x150] sm:$0xff]
        %v1251 = vld [vmem:[%s5 + $0x158] sm:$0xff]
        %v1252 = vld [vmem:[%s5 + $0x160] sm:$0xff]
        %v1253 = vld [vmem:[%s5 + $0x168] sm:$0xff]
        %v1254 = vld [vmem:[%s5 + $0x170] sm:$0xff]
        %v1255 = vld [vmem:[%s5 + $0x178] sm:$0xff]
        %v1256 = vld [vmem:[%s6] sm:$0x1]
        %v1258 = vlaneseq
        %v1259 = vshrl.u32 %v1258, 7
        %v1260 = vsub.s32 0, %v1259
        %v1261 = vrot.slane %v1256, %v1260
        %1263 = vmatprep.subr.mxu0 0.0
        %1264 = vmatpush1.msra.mxu0 %v1208
        %1265 = vmatprep.subr.mxu0 0.0
        %1266 = vmatpush1.msra.mxu0 %v1209
        %1267 = vmatprep.subr.mxu0 0.0
        %1268 = vmatpush1.msra.mxu0 %v1210
        %1269 = vmatprep.subr.mxu0 0.0
        %1270 = vmatpush1.msra.mxu0 %v1211
        %1271 = vmatprep.subr.mxu0 0.0
        %1272 = vmatpush1.msra.mxu0 %v1212
        %1273 = vmatprep.subr.mxu0 0.0
        %1274 = vmatpush1.msra.mxu0 %v1213
        %1275 = vmatprep.subr.mxu0 0.0
        %1276 = vmatpush1.msra.mxu0 %v1214
        %1277 = vmatprep.subr.mxu0 0.0
        %1278 = vmatpush1.msra.mxu0 %v1215
        %1279 = vmatprep.subr.mxu0 0.0
        %1280 = vmatpush1.msra.mxu0 %v1216
        %1281 = vmatprep.subr.mxu0 0.0
        %1282 = vmatpush1.msra.mxu0 %v1217
        %1283 = vmatprep.subr.mxu0 0.0
        %1284 = vmatpush1.msra.mxu0 %v1218
        %1285 = vmatprep.subr.mxu0 0.0
        %1286 = vmatpush1.msra.mxu0 %v1219
        %1287 = vmatprep.subr.mxu0 0.0
        %1288 = vmatpush1.msra.mxu0 %v1220
        %1289 = vmatprep.subr.mxu0 0.0
        %1290 = vmatpush1.msra.mxu0 %v1221
        %1291 = vmatprep.subr.mxu0 0.0
        %1292 = vmatpush1.msra.mxu0 %v1222
        %1293 = vmatprep.subr.mxu0 0.0
        %1294 = vmatpush1.msra.mxu0 %v1223
        %1295 = vmatprep.subr.mxu0 0.0
        %1296 = vmatpush1.msra.mxu0 %v1224
        %1297 = vmatprep.subr.mxu0 0.0
        %1298 = vmatpush1.msra.mxu0 %v1225
        %1299 = vmatprep.subr.mxu0 0.0
        %1300 = vmatpush1.msra.mxu0 %v1226
        %1301 = vmatprep.subr.mxu0 0.0
        %1302 = vmatpush1.msra.mxu0 %v1227
        %1303 = vmatprep.subr.mxu0 0.0
        %1304 = vmatpush1.msra.mxu0 %v1228
        %1305 = vmatprep.subr.mxu0 0.0
        %1306 = vmatpush1.msra.mxu0 %v1229
        %1307 = vmatprep.subr.mxu0 0.0
        %1308 = vmatpush1.msra.mxu0 %v1230
        %1309 = vmatprep.subr.mxu0 0.0
        %1310 = vmatpush1.msra.mxu0 %v1231
        %1311 = vmatprep.subr.mxu0 0.0
        %1312 = vmatpush1.msra.mxu0 %v1232
        %1313 = vmatprep.subr.mxu0 0.0
        %1314 = vmatpush1.msra.mxu0 %v1233
        %1315 = vmatprep.subr.mxu0 0.0
        %1316 = vmatpush1.msra.mxu0 %v1234
        %1317 = vmatprep.subr.mxu0 0.0
        %1318 = vmatpush1.msra.mxu0 %v1235
        %1319 = vmatprep.subr.mxu0 0.0
        %1320 = vmatpush1.msra.mxu0 %v1236
        %1321 = vmatprep.subr.mxu0 0.0
        %1322 = vmatpush1.msra.mxu0 %v1237
        %1323 = vmatprep.subr.mxu0 0.0
        %1324 = vmatpush1.msra.mxu0 %v1238
        %1325 = vmatprep.subr.mxu0 0.0
        %1326 = vmatpush1.msra.mxu0 %v1239
        %1327 = vmatprep.mubr.f32.mxu0 %v1206
        %1328 = vmatmul.mubr.f32.gmra.mrb[0].mxu0 %v1205
        %v1329 = vpop.f32.mrb[0].mxu0
        %v1330 = vadd.f32 %v1261, %v1329
        %v1331 = vpop.f32.mrb[0].mxu0
        %1332 = vdwg.mxu0
        %1333 = vmatprep.subr.mxu0 0.0
        %1334 = vmatpush1.msra.mxu0 %v1240
        %1335 = vmatprep.subr.mxu0 0.0
        %1336 = vmatpush1.msra.mxu0 %v1241
        %1337 = vmatprep.subr.mxu0 0.0
        %1338 = vmatpush1.msra.mxu0 %v1242
        %1339 = vmatprep.subr.mxu0 0.0
        %1340 = vmatpush1.msra.mxu0 %v1243
        %1341 = vmatprep.subr.mxu0 0.0
        %1342 = vmatpush1.msra.mxu0 %v1244
        %1343 = vmatprep.subr.mxu0 0.0
        %1344 = vmatpush1.msra.mxu0 %v1245
        %1345 = vmatprep.subr.mxu0 0.0
        %1346 = vmatpush1.msra.mxu0 %v1246
        %1347 = vmatprep.subr.mxu0 0.0
        %1348 = vmatpush1.msra.mxu0 %v1247
        %1349 = vmatprep.subr.mxu0 0.0
        %1350 = vmatpush1.msra.mxu0 %v1248
        %1351 = vmatprep.subr.mxu0 0.0
        %1352 = vmatpush1.msra.mxu0 %v1249
        %1353 = vmatprep.subr.mxu0 0.0
        %1354 = vmatpush1.msra.mxu0 %v1250
        %1355 = vmatprep.subr.mxu0 0.0
        %1356 = vmatpush1.msra.mxu0 %v1251
        %1357 = vmatprep.subr.mxu0 0.0
        %1358 = vmatpush1.msra.mxu0 %v1252
        %1359 = vmatprep.subr.mxu0 0.0
        %1360 = vmatpush1.msra.mxu0 %v1253
        %1361 = vmatprep.subr.mxu0 0.0
        %1362 = vmatpush1.msra.mxu0 %v1254
        %1363 = vmatprep.subr.mxu0 0.0
        %1364 = vmatpush1.msra.mxu0 %v1255
        %1365 = vmatprep.subr.mxu0 0.0
        %1366 = vmatpush1.msra.mxu0 0.0
        %1367 = vmatprep.subr.mxu0 0.0
        %1368 = vmatpush1.msra.mxu0 0.0
        %1369 = vmatprep.subr.mxu0 0.0
        %1370 = vmatpush1.msra.mxu0 0.0
        %1371 = vmatprep.subr.mxu0 0.0
        %1372 = vmatpush1.msra.mxu0 0.0
        %1373 = vmatprep.subr.mxu0 0.0
        %1374 = vmatpush1.msra.mxu0 0.0
        %1375 = vmatprep.subr.mxu0 0.0
        %1376 = vmatpush1.msra.mxu0 0.0
        %1377 = vmatprep.subr.mxu0 0.0
        %1378 = vmatpush1.msra.mxu0 0.0
        %1379 = vmatprep.subr.mxu0 0.0
        %1380 = vmatpush1.msra.mxu0 0.0
        %1381 = vmatprep.subr.mxu0 0.0
        %1382 = vmatpush1.msra.mxu0 0.0
        %1383 = vmatprep.subr.mxu0 0.0
        %1384 = vmatpush1.msra.mxu0 0.0
        %1385 = vmatprep.subr.mxu0 0.0
        %1386 = vmatpush1.msra.mxu0 0.0
        %1387 = vmatprep.subr.mxu0 0.0
        %1388 = vmatpush1.msra.mxu0 0.0
        %1389 = vmatprep.subr.mxu0 0.0
        %1390 = vmatpush1.msra.mxu0 0.0
        %1391 = vmatprep.subr.mxu0 0.0
        %1392 = vmatpush1.msra.mxu0 0.0
        %1393 = vmatprep.subr.mxu0 0.0
        %1394 = vmatpush1.msra.mxu0 0.0
        %1395 = vmatprep.subr.mxu0 0.0
        %1396 = vmatpush1.msra.mxu0 0.0
        %1397 = vmatprep.mubr.f32.mxu0 0.0
        %1398 = vmatmul.mubr.f32.gmra.mrb[0].mxu0 %v1207
        %v1399 = vpop.f32.mrb[0].mxu0
        %v1400 = vadd.f32 %v1330, %v1399
        %v1401 = vpop.f32.mrb[0].mxu0
        %1402 = vdwg.mxu0
        %1403 = vst [vmem:[%s462] sm:$0xff] %v1400
        %v1404 = vld [vmem:[%s7] sm:$0xff]
        %v1405 = vld [vmem:[%s7 + $0x8] sm:$0xff]
        %v1406 = vld [vmem:[%s7 + $0x10] sm:$0xff]
        %v1407 = vld [vmem:[%s7 + $0x18] sm:$0xff]
        %v1408 = vld [vmem:[%s7 + $0x20] sm:$0xff]
        %v1409 = vld [vmem:[%s7 + $0x28] sm:$0xff]
        %v1410 = vld [vmem:[%s7 + $0x30] sm:$0xff]
        %v1411 = vld [vmem:[%s7 + $0x38] sm:$0xff]
        %v1412 = vld [vmem:[%s7 + $0x40] sm:$0xff]
        %v1413 = vld [vmem:[%s7 + $0x48] sm:$0xff]
        %v1414 = vld [vmem:[%s7 + $0x50] sm:$0xff]
        %v1415 = vld [vmem:[%s7 + $0x58] sm:$0xff]
        %v1416 = vld [vmem:[%s7 + $0x60] sm:$0xff]
        %v1417 = vld [vmem:[%s7 + $0x68] sm:$0xff]
        %v1418 = vld [vmem:[%s7 + $0x70] sm:$0xff]
        %v1419 = vld [vmem:[%s7 + $0x78] sm:$0xff]
        %v1420 = vld [vmem:[%s7 + $0x80] sm:$0xff]
        %v1421 = vld [vmem:[%s7 + $0x88] sm:$0xff]
        %v1422 = vld [vmem:[%s7 + $0x90] sm:$0xff]
        %v1423 = vld [vmem:[%s7 + $0x98] sm:$0xff]
        %v1424 = vld [vmem:[%s7 + $0xa0] sm:$0xff]
        %v1425 = vld [vmem:[%s7 + $0xa8] sm:$0xff]
        %v1426 = vld [vmem:[%s7 + $0xb0] sm:$0xff]
        %v1427 = vld [vmem:[%s7 + $0xb8] sm:$0xff]
        %v1428 = vld [vmem:[%s7 + $0xc0] sm:$0xff]
        %v1429 = vld [vmem:[%s7 + $0xc8] sm:$0xff]
        %v1430 = vld [vmem:[%s7 + $0xd0] sm:$0xff]
        %v1431 = vld [vmem:[%s7 + $0xd8] sm:$0xff]
        %v1432 = vld [vmem:[%s7 + $0xe0] sm:$0xff]
        %v1433 = vld [vmem:[%s7 + $0xe8] sm:$0xff]
        %v1434 = vld [vmem:[%s7 + $0xf0] sm:$0xff]
        %v1435 = vld [vmem:[%s7 + $0xf8] sm:$0xff]
        %v1436 = vld [vmem:[%s7 + $0x100] sm:$0xff]
        %v1437 = vld [vmem:[%s7 + $0x108] sm:$0xff]
        %v1438 = vld [vmem:[%s7 + $0x110] sm:$0xff]
        %v1439 = vld [vmem:[%s7 + $0x118] sm:$0xff]
        %v1440 = vld [vmem:[%s7 + $0x120] sm:$0xff]
        %v1441 = vld [vmem:[%s7 + $0x128] sm:$0xff]
        %v1442 = vld [vmem:[%s7 + $0x130] sm:$0xff]
        %v1443 = vld [vmem:[%s7 + $0x138] sm:$0xff]
        %v1444 = vld [vmem:[%s7 + $0x140] sm:$0xff]
        %v1445 = vld [vmem:[%s7 + $0x148] sm:$0xff]
        %v1446 = vld [vmem:[%s7 + $0x150] sm:$0xff]
        %v1447 = vld [vmem:[%s7 + $0x158] sm:$0xff]
        %v1448 = vld [vmem:[%s7 + $0x160] sm:$0xff]
        %v1449 = vld [vmem:[%s7 + $0x168] sm:$0xff]
        %v1450 = vld [vmem:[%s7 + $0x170] sm:$0xff]
        %v1451 = vld [vmem:[%s7 + $0x178] sm:$0xff]
        %v1452 = vld [vmem:[%s8] sm:$0x7]
        %v1454 = vlaneseq
        %v1455 = vshrl.u32 %v1454, 7
        %v1456 = vsub.s32 0, %v1455
        %v1457 = vrot.slane %v1452, %v1456
        %v1458 = vlaneseq
        %v1459 = vshrl.u32 %v1458, 7
        %v1460 = vsub.s32 1, %v1459
        %v1461 = vrot.slane %v1452, %v1460
        %v1462 = vlaneseq
        %v1463 = vshrl.u32 %v1462, 7
        %v1464 = vsub.s32 2, %v1463
        %v1465 = vrot.slane %v1452, %v1464
        %1469 = vmatprep.subr.mxu0 %v1405
        %1470 = vmatpush1.msra.mxu0 %v1404
        %1471 = vmatprep.subr.mxu0 %v1408
        %1472 = vmatpush1.msra.mxu0 %v1407
        %1473 = vmatprep.subr.mxu0 %v1411
        %1474 = vmatpush1.msra.mxu0 %v1410
        %1475 = vmatprep.subr.mxu0 %v1414
        %1476 = vmatpush1.msra.mxu0 %v1413
        %1477 = vmatprep.subr.mxu0 %v1417
        %1478 = vmatpush1.msra.mxu0 %v1416
        %1479 = vmatprep.subr.mxu0 %v1420
        %1480 = vmatpush1.msra.mxu0 %v1419
        %1481 = vmatprep.subr.mxu0 %v1423
        %1482 = vmatpush1.msra.mxu0 %v1422
        %1483 = vmatprep.subr.mxu0 %v1426
        %1484 = vmatpush1.msra.mxu0 %v1425
        %1485 = vmatprep.subr.mxu0 %v1429
        %1486 = vmatpush1.msra.mxu0 %v1428
        %1487 = vmatprep.subr.mxu0 %v1432
        %1488 = vmatpush1.msra.mxu0 %v1431
        %1489 = vmatprep.subr.mxu0 %v1435
        %1490 = vmatpush1.msra.mxu0 %v1434
        %1491 = vmatprep.subr.mxu0 %v1438
        %1492 = vmatpush1.msra.mxu0 %v1437
        %1493 = vmatprep.subr.mxu0 %v1441
        %1494 = vmatpush1.msra.mxu0 %v1440
        %1495 = vmatprep.subr.mxu0 %v1444
        %1496 = vmatpush1.msra.mxu0 %v1443
        %1497 = vmatprep.subr.mxu0 %v1447
        %1498 = vmatpush1.msra.mxu0 %v1446
        %1499 = vmatprep.subr.mxu0 %v1450
        %1500 = vmatpush1.msra.mxu0 %v1449
        %1501 = vmatprep.subr.mxu0 0.0
        %1502 = vmatpush1.msra.mxu0 0.0
        %1503 = vmatprep.subr.mxu0 0.0
        %1504 = vmatpush1.msra.mxu0 0.0
        %1505 = vmatprep.subr.mxu0 0.0
        %1506 = vmatpush1.msra.mxu0 0.0
        %1507 = vmatprep.subr.mxu0 0.0
        %1508 = vmatpush1.msra.mxu0 0.0
        %1509 = vmatprep.subr.mxu0 0.0
        %1510 = vmatpush1.msra.mxu0 0.0
        %1511 = vmatprep.subr.mxu0 0.0
        %1512 = vmatpush1.msra.mxu0 0.0
        %1513 = vmatprep.subr.mxu0 0.0
        %1514 = vmatpush1.msra.mxu0 0.0
        %1515 = vmatprep.subr.mxu0 0.0
        %1516 = vmatpush1.msra.mxu0 0.0
        %1517 = vmatprep.subr.mxu0 0.0
        %1518 = vmatpush1.msra.mxu0 0.0
        %1519 = vmatprep.subr.mxu0 0.0
        %1520 = vmatpush1.msra.mxu0 0.0
        %1521 = vmatprep.subr.mxu0 0.0
        %1522 = vmatpush1.msra.mxu0 0.0
        %1523 = vmatprep.subr.mxu0 0.0
        %1524 = vmatpush1.msra.mxu0 0.0
        %1525 = vmatprep.subr.mxu0 0.0
        %1526 = vmatpush1.msra.mxu0 0.0
        %1527 = vmatprep.subr.mxu0 0.0
        %1528 = vmatpush1.msra.mxu0 0.0
        %1529 = vmatprep.subr.mxu0 0.0
        %1530 = vmatpush1.msra.mxu0 0.0
        %1531 = vmatprep.subr.mxu0 0.0
        %1532 = vmatpush1.msra.mxu0 0.0
        %1533 = vmatprep.mubr.f32.mxu0 0.0
        %1534 = vmatmul.mubr.f32.gmra.mrb[0].mxu0 %v1400
        %v1535 = vpop.f32.mrb[0].mxu0
        %v1536 = vadd.f32 %v1457, %v1535
        %v1537 = vpop.f32.mrb[0].mxu0
        %v1538 = vadd.f32 %v1461, %v1537
        %1539 = vdwg.mxu0
        %1540 = vmatprep.subr.mxu0 0.0
        %1541 = vmatpush1.msra.mxu0 %v1406
        %1542 = vmatprep.subr.mxu0 0.0
        %1543 = vmatpush1.msra.mxu0 %v1409
        %1544 = vmatprep.subr.mxu0 0.0
        %1545 = vmatpush1.msra.mxu0 %v1412
        %1546 = vmatprep.subr.mxu0 0.0
        %1547 = vmatpush1.msra.mxu0 %v1415
        %1548 = vmatprep.subr.mxu0 0.0
        %1549 = vmatpush1.msra.mxu0 %v1418
        %1550 = vmatprep.subr.mxu0 0.0
        %1551 = vmatpush1.msra.mxu0 %v1421
        %1552 = vmatprep.subr.mxu0 0.0
        %1553 = vmatpush1.msra.mxu0 %v1424
        %1554 = vmatprep.subr.mxu0 0.0
        %1555 = vmatpush1.msra.mxu0 %v1427
        %1556 = vmatprep.subr.mxu0 0.0
        %1557 = vmatpush1.msra.mxu0 %v1430
        %1558 = vmatprep.subr.mxu0 0.0
        %1559 = vmatpush1.msra.mxu0 %v1433
        %1560 = vmatprep.subr.mxu0 0.0
        %1561 = vmatpush1.msra.mxu0 %v1436
        %1562 = vmatprep.subr.mxu0 0.0
        %1563 = vmatpush1.msra.mxu0 %v1439
        %1564 = vmatprep.subr.mxu0 0.0
        %1565 = vmatpush1.msra.mxu0 %v1442
        %1566 = vmatprep.subr.mxu0 0.0
        %1567 = vmatpush1.msra.mxu0 %v1445
        %1568 = vmatprep.subr.mxu0 0.0
        %1569 = vmatpush1.msra.mxu0 %v1448
        %1570 = vmatprep.subr.mxu0 0.0
        %1571 = vmatpush1.msra.mxu0 %v1451
        %1572 = vmatprep.subr.mxu0 0.0
        %1573 = vmatpush1.msra.mxu0 0.0
        %1574 = vmatprep.subr.mxu0 0.0
        %1575 = vmatpush1.msra.mxu0 0.0
        %1576 = vmatprep.subr.mxu0 0.0
        %1577 = vmatpush1.msra.mxu0 0.0
        %1578 = vmatprep.subr.mxu0 0.0
        %1579 = vmatpush1.msra.mxu0 0.0
        %1580 = vmatprep.subr.mxu0 0.0
        %1581 = vmatpush1.msra.mxu0 0.0
        %1582 = vmatprep.subr.mxu0 0.0
        %1583 = vmatpush1.msra.mxu0 0.0
        %1584 = vmatprep.subr.mxu0 0.0
        %1585 = vmatpush1.msra.mxu0 0.0
        %1586 = vmatprep.subr.mxu0 0.0
        %1587 = vmatpush1.msra.mxu0 0.0
        %1588 = vmatprep.subr.mxu0 0.0
        %1589 = vmatpush1.msra.mxu0 0.0
        %1590 = vmatprep.subr.mxu0 0.0
        %1591 = vmatpush1.msra.mxu0 0.0
        %1592 = vmatprep.subr.mxu0 0.0
        %1593 = vmatpush1.msra.mxu0 0.0
        %1594 = vmatprep.subr.mxu0 0.0
        %1595 = vmatpush1.msra.mxu0 0.0
        %1596 = vmatprep.subr.mxu0 0.0
        %1597 = vmatpush1.msra.mxu0 0.0
        %1598 = vmatprep.subr.mxu0 0.0
        %1599 = vmatpush1.msra.mxu0 0.0
        %1600 = vmatprep.subr.mxu0 0.0
        %1601 = vmatpush1.msra.mxu0 0.0
        %1602 = vmatprep.subr.mxu0 0.0
        %1603 = vmatpush1.msra.mxu0 0.0
        %1604 = vmatprep.mubr.f32.mxu0 0.0
        %1605 = vmatmul.mubr.f32.gmra.mrb[0].mxu0 %v1400
        %v1606 = vpop.f32.mrb[0].mxu0
        %v1607 = vadd.f32 %v1465, %v1606
        %v1608 = vpop.f32.mrb[0].mxu0
        %1609 = vdwg.mxu0
        %v1610 = vmul.f32 %v1536, 0.01
        %v1611 = vmul.f32 %v1538, 0.01
        %v1612 = vmul.f32 %v1607, 0.01
        %v1613 = vmax.f32 %v1536, %v1610
        %v1614 = vmax.f32 %v1538, %v1611
        %v1615 = vmax.f32 %v1607, %v1612
        %v1616 = vld [vmem:[%s9] sm:$0xff]
        %v1617 = vld [vmem:[%s9 + $0x8] sm:$0xff]
        %v1618 = vld [vmem:[%s9 + $0x10] sm:$0xff]
        %v1619 = vld [vmem:[%s9 + $0x18] sm:$0xff]
        %v1620 = vld [vmem:[%s9 + $0x20] sm:$0xff]
        %v1621 = vld [vmem:[%s9 + $0x28] sm:$0xff]
        %v1622 = vld [vmem:[%s9 + $0x30] sm:$0xff]
        %v1623 = vld [vmem:[%s9 + $0x38] sm:$0xff]
        %v1624 = vld [vmem:[%s9 + $0x40] sm:$0xff]
        %v1625 = vld [vmem:[%s9 + $0x48] sm:$0xff]
        %v1626 = vld [vmem:[%s9 + $0x50] sm:$0xff]
        %v1627 = vld [vmem:[%s9 + $0x58] sm:$0xff]
        %v1628 = vld [vmem:[%s9 + $0x60] sm:$0xff]
        %v1629 = vld [vmem:[%s9 + $0x68] sm:$0xff]
        %v1630 = vld [vmem:[%s9 + $0x70] sm:$0xff]
        %v1631 = vld [vmem:[%s9 + $0x78] sm:$0xff]
        %v1632 = vld [vmem:[%s9 + $0x80] sm:$0xff]
        %v1633 = vld [vmem:[%s9 + $0x88] sm:$0xff]
        %v1634 = vld [vmem:[%s9 + $0x90] sm:$0xff]
        %v1635 = vld [vmem:[%s9 + $0x98] sm:$0xff]
        %v1636 = vld [vmem:[%s9 + $0xa0] sm:$0xff]
        %v1637 = vld [vmem:[%s9 + $0xa8] sm:$0xff]
        %v1638 = vld [vmem:[%s9 + $0xb0] sm:$0xff]
        %v1639 = vld [vmem:[%s9 + $0xb8] sm:$0xff]
        %v1640 = vld [vmem:[%s9 + $0xc0] sm:$0xff]
        %v1641 = vld [vmem:[%s9 + $0xc8] sm:$0xff]
        %v1642 = vld [vmem:[%s9 + $0xd0] sm:$0xff]
        %v1643 = vld [vmem:[%s9 + $0xd8] sm:$0xff]
        %v1644 = vld [vmem:[%s9 + $0xe0] sm:$0xff]
        %v1645 = vld [vmem:[%s9 + $0xe8] sm:$0xff]
        %v1646 = vld [vmem:[%s9 + $0xf0] sm:$0xff]
        %v1647 = vld [vmem:[%s9 + $0xf8] sm:$0xff]
        %v1648 = vld [vmem:[%s9 + $0x100] sm:$0xff]
        %v1649 = vld [vmem:[%s9 + $0x108] sm:$0xff]
        %v1650 = vld [vmem:[%s9 + $0x110] sm:$0xff]
        %v1651 = vld [vmem:[%s9 + $0x118] sm:$0xff]
        %v1652 = vld [vmem:[%s9 + $0x120] sm:$0xff]
        %v1653 = vld [vmem:[%s9 + $0x128] sm:$0xff]
        %v1654 = vld [vmem:[%s9 + $0x130] sm:$0xff]
        %v1655 = vld [vmem:[%s9 + $0x138] sm:$0xff]
        %v1656 = vld [vmem:[%s9 + $0x140] sm:$0xff]
        %v1657 = vld [vmem:[%s9 + $0x148] sm:$0xff]
        %v1658 = vld [vmem:[%s9 + $0x150] sm:$0xff]
        %v1659 = vld [vmem:[%s9 + $0x158] sm:$0xff]
        %v1660 = vld [vmem:[%s9 + $0x160] sm:$0xff]
        %v1661 = vld [vmem:[%s9 + $0x168] sm:$0xff]
        %v1662 = vld [vmem:[%s9 + $0x170] sm:$0xff]
        %v1663 = vld [vmem:[%s9 + $0x178] sm:$0xff]
        %v1664 = vld [vmem:[%s9 + $0x180] sm:$0xff]
        %v1665 = vld [vmem:[%s9 + $0x188] sm:$0xff]
        %v1666 = vld [vmem:[%s9 + $0x190] sm:$0xff]
        %v1667 = vld [vmem:[%s9 + $0x198] sm:$0xff]
        %v1668 = vld [vmem:[%s9 + $0x1a0] sm:$0xff]
        %v1669 = vld [vmem:[%s9 + $0x1a8] sm:$0xff]
        %v1670 = vld [vmem:[%s9 + $0x1b0] sm:$0xff]
        %v1671 = vld [vmem:[%s9 + $0x1b8] sm:$0xff]
        %v1672 = vld [vmem:[%s9 + $0x1c0] sm:$0xff]
        %v1673 = vld [vmem:[%s9 + $0x1c8] sm:$0xff]
        %v1674 = vld [vmem:[%s9 + $0x1d0] sm:$0xff]
        %v1675 = vld [vmem:[%s9 + $0x1d8] sm:$0xff]
        %v1676 = vld [vmem:[%s9 + $0x1e0] sm:$0xff]
        %v1677 = vld [vmem:[%s9 + $0x1e8] sm:$0xff]
        %v1678 = vld [vmem:[%s9 + $0x1f0] sm:$0xff]
        %v1679 = vld [vmem:[%s9 + $0x1f8] sm:$0xff]
        %v1680 = vld [vmem:[%s9 + $0x200] sm:$0xff]
        %v1681 = vld [vmem:[%s9 + $0x208] sm:$0xff]
        %v1682 = vld [vmem:[%s9 + $0x210] sm:$0xff]
        %v1683 = vld [vmem:[%s9 + $0x218] sm:$0xff]
        %v1684 = vld [vmem:[%s9 + $0x220] sm:$0xff]
        %v1685 = vld [vmem:[%s9 + $0x228] sm:$0xff]
        %v1686 = vld [vmem:[%s9 + $0x230] sm:$0xff]
        %v1687 = vld [vmem:[%s9 + $0x238] sm:$0xff]
        %v1688 = vld [vmem:[%s9 + $0x240] sm:$0xff]
        %v1689 = vld [vmem:[%s9 + $0x248] sm:$0xff]
        %v1690 = vld [vmem:[%s9 + $0x250] sm:$0xff]
        %v1691 = vld [vmem:[%s9 + $0x258] sm:$0xff]
        %v1692 = vld [vmem:[%s9 + $0x260] sm:$0xff]
        %v1693 = vld [vmem:[%s9 + $0x268] sm:$0xff]
        %v1694 = vld [vmem:[%s9 + $0x270] sm:$0xff]
        %v1695 = vld [vmem:[%s9 + $0x278] sm:$0xff]
        %v1696 = vld [vmem:[%s9 + $0x280] sm:$0xff]
        %v1697 = vld [vmem:[%s9 + $0x288] sm:$0xff]
        %v1698 = vld [vmem:[%s9 + $0x290] sm:$0xff]
        %v1699 = vld [vmem:[%s9 + $0x298] sm:$0xff]
        %v1700 = vld [vmem:[%s9 + $0x2a0] sm:$0xff]
        %v1701 = vld [vmem:[%s9 + $0x2a8] sm:$0xff]
        %v1702 = vld [vmem:[%s9 + $0x2b0] sm:$0xff]
        %v1703 = vld [vmem:[%s9 + $0x2b8] sm:$0xff]
        %v1704 = vld [vmem:[%s9 + $0x2c0] sm:$0xff]
        %v1705 = vld [vmem:[%s9 + $0x2c8] sm:$0xff]
        %v1706 = vld [vmem:[%s9 + $0x2d0] sm:$0xff]
        %v1707 = vld [vmem:[%s9 + $0x2d8] sm:$0xff]
        %v1708 = vld [vmem:[%s9 + $0x2e0] sm:$0xff]
        %v1709 = vld [vmem:[%s9 + $0x2e8] sm:$0xff]
        %v1710 = vld [vmem:[%s9 + $0x2f0] sm:$0xff]
        %v1711 = vld [vmem:[%s9 + $0x2f8] sm:$0xff]
        %v1712 = vld [vmem:[%s9 + $0x300] sm:$0xff]
        %v1713 = vld [vmem:[%s9 + $0x308] sm:$0xff]
        %v1714 = vld [vmem:[%s9 + $0x310] sm:$0xff]
        %v1715 = vld [vmem:[%s9 + $0x318] sm:$0xff]
        %v1716 = vld [vmem:[%s9 + $0x320] sm:$0xff]
        %v1717 = vld [vmem:[%s9 + $0x328] sm:$0xff]
        %v1718 = vld [vmem:[%s9 + $0x330] sm:$0xff]
        %v1719 = vld [vmem:[%s9 + $0x338] sm:$0xff]
        %v1720 = vld [vmem:[%s9 + $0x340] sm:$0xff]
        %v1721 = vld [vmem:[%s9 + $0x348] sm:$0xff]
        %v1722 = vld [vmem:[%s9 + $0x350] sm:$0xff]
        %v1723 = vld [vmem:[%s9 + $0x358] sm:$0xff]
        %v1724 = vld [vmem:[%s9 + $0x360] sm:$0xff]
        %v1725 = vld [vmem:[%s9 + $0x368] sm:$0xff]
        %v1726 = vld [vmem:[%s9 + $0x370] sm:$0xff]
        %v1727 = vld [vmem:[%s9 + $0x378] sm:$0xff]
        %v1728 = vld [vmem:[%s9 + $0x380] sm:$0xff]
        %v1729 = vld [vmem:[%s9 + $0x388] sm:$0xff]
        %v1730 = vld [vmem:[%s9 + $0x390] sm:$0xff]
        %v1731 = vld [vmem:[%s9 + $0x398] sm:$0xff]
        %v1732 = vld [vmem:[%s9 + $0x3a0] sm:$0xff]
        %v1733 = vld [vmem:[%s9 + $0x3a8] sm:$0xff]
        %v1734 = vld [vmem:[%s9 + $0x3b0] sm:$0xff]
        %v1735 = vld [vmem:[%s9 + $0x3b8] sm:$0xff]
        %v1736 = vld [vmem:[%s9 + $0x3c0] sm:$0xff]
        %v1737 = vld [vmem:[%s9 + $0x3c8] sm:$0xff]
        %v1738 = vld [vmem:[%s9 + $0x3d0] sm:$0xff]
        %v1739 = vld [vmem:[%s9 + $0x3d8] sm:$0xff]
        %v1740 = vld [vmem:[%s9 + $0x3e0] sm:$0xff]
        %v1741 = vld [vmem:[%s9 + $0x3e8] sm:$0xff]
        %v1742 = vld [vmem:[%s9 + $0x3f0] sm:$0xff]
        %v1743 = vld [vmem:[%s9 + $0x3f8] sm:$0xff]
        %v1744 = vld [vmem:[%s9 + $0x400] sm:$0xff]
        %v1745 = vld [vmem:[%s9 + $0x408] sm:$0xff]
        %v1746 = vld [vmem:[%s9 + $0x410] sm:$0xff]
        %v1747 = vld [vmem:[%s9 + $0x418] sm:$0xff]
        %v1748 = vld [vmem:[%s9 + $0x420] sm:$0xff]
        %v1749 = vld [vmem:[%s9 + $0x428] sm:$0xff]
        %v1750 = vld [vmem:[%s9 + $0x430] sm:$0xff]
        %v1751 = vld [vmem:[%s9 + $0x438] sm:$0xff]
        %v1752 = vld [vmem:[%s9 + $0x440] sm:$0xff]
        %v1753 = vld [vmem:[%s9 + $0x448] sm:$0xff]
        %v1754 = vld [vmem:[%s9 + $0x450] sm:$0xff]
        %v1755 = vld [vmem:[%s9 + $0x458] sm:$0xff]
        %v1756 = vld [vmem:[%s9 + $0x460] sm:$0xff]
        %v1757 = vld [vmem:[%s9 + $0x468] sm:$0xff]
        %v1758 = vld [vmem:[%s9 + $0x470] sm:$0xff]
        %v1759 = vld [vmem:[%s9 + $0x478] sm:$0xff]
        %v1760 = vld [vmem:[%s9 + $0x480] sm:$0xff]
        %v1761 = vld [vmem:[%s9 + $0x488] sm:$0xff]
        %v1762 = vld [vmem:[%s9 + $0x490] sm:$0xff]
        %v1763 = vld [vmem:[%s9 + $0x498] sm:$0xff]
        %v1764 = vld [vmem:[%s9 + $0x4a0] sm:$0xff]
        %v1765 = vld [vmem:[%s9 + $0x4a8] sm:$0xff]
        %v1766 = vld [vmem:[%s9 + $0x4b0] sm:$0xff]
        %v1767 = vld [vmem:[%s9 + $0x4b8] sm:$0xff]
        %v1768 = vld [vmem:[%s9 + $0x4c0] sm:$0xff]
        %v1769 = vld [vmem:[%s9 + $0x4c8] sm:$0xff]
        %v1770 = vld [vmem:[%s9 + $0x4d0] sm:$0xff]
        %v1771 = vld [vmem:[%s9 + $0x4d8] sm:$0xff]
        %v1772 = vld [vmem:[%s9 + $0x4e0] sm:$0xff]
        %v1773 = vld [vmem:[%s9 + $0x4e8] sm:$0xff]
        %v1774 = vld [vmem:[%s9 + $0x4f0] sm:$0xff]
        %v1775 = vld [vmem:[%s9 + $0x4f8] sm:$0xff]
        %v1776 = vld [vmem:[%s9 + $0x500] sm:$0xff]
        %v1777 = vld [vmem:[%s9 + $0x508] sm:$0xff]
        %v1778 = vld [vmem:[%s9 + $0x510] sm:$0xff]
        %v1779 = vld [vmem:[%s9 + $0x518] sm:$0xff]
        %v1780 = vld [vmem:[%s9 + $0x520] sm:$0xff]
        %v1781 = vld [vmem:[%s9 + $0x528] sm:$0xff]
        %v1782 = vld [vmem:[%s9 + $0x530] sm:$0xff]
        %v1783 = vld [vmem:[%s9 + $0x538] sm:$0xff]
        %v1784 = vld [vmem:[%s9 + $0x540] sm:$0xff]
        %v1785 = vld [vmem:[%s9 + $0x548] sm:$0xff]
        %v1786 = vld [vmem:[%s9 + $0x550] sm:$0xff]
        %v1787 = vld [vmem:[%s9 + $0x558] sm:$0xff]
        %v1788 = vld [vmem:[%s9 + $0x560] sm:$0xff]
        %v1789 = vld [vmem:[%s9 + $0x568] sm:$0xff]
        %v1790 = vld [vmem:[%s9 + $0x570] sm:$0xff]
        %v1791 = vld [vmem:[%s9 + $0x578] sm:$0xff]
        %v1792 = vld [vmem:[%s9 + $0x580] sm:$0xff]
        %v1793 = vld [vmem:[%s9 + $0x588] sm:$0xff]
        %v1794 = vld [vmem:[%s9 + $0x590] sm:$0xff]
        %v1795 = vld [vmem:[%s9 + $0x598] sm:$0xff]
        %v1796 = vld [vmem:[%s9 + $0x5a0] sm:$0xff]
        %v1797 = vld [vmem:[%s9 + $0x5a8] sm:$0xff]
        %v1798 = vld [vmem:[%s9 + $0x5b0] sm:$0xff]
        %v1799 = vld [vmem:[%s9 + $0x5b8] sm:$0xff]
        %v1800 = vld [vmem:[%s9 + $0x5c0] sm:$0xff]
        %v1801 = vld [vmem:[%s9 + $0x5c8] sm:$0xff]
        %v1802 = vld [vmem:[%s9 + $0x5d0] sm:$0xff]
        %v1803 = vld [vmem:[%s9 + $0x5d8] sm:$0xff]
        %v1804 = vld [vmem:[%s9 + $0x5e0] sm:$0xff]
        %v1805 = vld [vmem:[%s9 + $0x5e8] sm:$0xff]
        %v1806 = vld [vmem:[%s9 + $0x5f0] sm:$0xff]
        %v1807 = vld [vmem:[%s9 + $0x5f8] sm:$0xff]
        %v1808 = vld [vmem:[%s10] sm:$0xf]
        %v1810 = vlaneseq
        %v1811 = vshrl.u32 %v1810, 7
        %v1812 = vsub.s32 0, %v1811
        %v1813 = vrot.slane %v1808, %v1812
        %v1814 = vlaneseq
        %v1815 = vshrl.u32 %v1814, 7
        %v1816 = vsub.s32 1, %v1815
        %v1817 = vrot.slane %v1808, %v1816
        %v1818 = vlaneseq
        %v1819 = vshrl.u32 %v1818, 7
        %v1820 = vsub.s32 2, %v1819
        %v1821 = vrot.slane %v1808, %v1820
        %v1822 = vlaneseq
        %v1823 = vshrl.u32 %v1822, 7
        %v1824 = vsub.s32 3, %v1823
        %v1825 = vrot.slane %v1808, %v1824
        %1830 = vmatprep.subr.mxu0 %v1617
        %1831 = vmatpush1.msra.mxu0 %v1616
        %1832 = vmatprep.subr.mxu0 %v1621
        %1833 = vmatpush1.msra.mxu0 %v1620
        %1834 = vmatprep.subr.mxu0 %v1625
        %1835 = vmatpush1.msra.mxu0 %v1624
        %1836 = vmatprep.subr.mxu0 %v1629
        %1837 = vmatpush1.msra.mxu0 %v1628
        %1838 = vmatprep.subr.mxu0 %v1633
        %1839 = vmatpush1.msra.mxu0 %v1632
        %1840 = vmatprep.subr.mxu0 %v1637
        %1841 = vmatpush1.msra.mxu0 %v1636
        %1842 = vmatprep.subr.mxu0 %v1641
        %1843 = vmatpush1.msra.mxu0 %v1640
        %1844 = vmatprep.subr.mxu0 %v1645
        %1845 = vmatpush1.msra.mxu0 %v1644
        %1846 = vmatprep.subr.mxu0 %v1649
        %1847 = vmatpush1.msra.mxu0 %v1648
        %1848 = vmatprep.subr.mxu0 %v1653
        %1849 = vmatpush1.msra.mxu0 %v1652
        %1850 = vmatprep.subr.mxu0 %v1657
        %1851 = vmatpush1.msra.mxu0 %v1656
        %1852 = vmatprep.subr.mxu0 %v1661
        %1853 = vmatpush1.msra.mxu0 %v1660
        %1854 = vmatprep.subr.mxu0 %v1665
        %1855 = vmatpush1.msra.mxu0 %v1664
        %1856 = vmatprep.subr.mxu0 %v1669
        %1857 = vmatpush1.msra.mxu0 %v1668
        %1858 = vmatprep.subr.mxu0 %v1673
        %1859 = vmatpush1.msra.mxu0 %v1672
        %1860 = vmatprep.subr.mxu0 %v1677
        %1861 = vmatpush1.msra.mxu0 %v1676
        %1862 = vmatprep.subr.mxu0 %v1681
        %1863 = vmatpush1.msra.mxu0 %v1680
        %1864 = vmatprep.subr.mxu0 %v1685
        %1865 = vmatpush1.msra.mxu0 %v1684
        %1866 = vmatprep.subr.mxu0 %v1689
        %1867 = vmatpush1.msra.mxu0 %v1688
        %1868 = vmatprep.subr.mxu0 %v1693
        %1869 = vmatpush1.msra.mxu0 %v1692
        %1870 = vmatprep.subr.mxu0 %v1697
        %1871 = vmatpush1.msra.mxu0 %v1696
        %1872 = vmatprep.subr.mxu0 %v1701
        %1873 = vmatpush1.msra.mxu0 %v1700
        %1874 = vmatprep.subr.mxu0 %v1705
        %1875 = vmatpush1.msra.mxu0 %v1704
        %1876 = vmatprep.subr.mxu0 %v1709
        %1877 = vmatpush1.msra.mxu0 %v1708
        %1878 = vmatprep.subr.mxu0 %v1713
        %1879 = vmatpush1.msra.mxu0 %v1712
        %1880 = vmatprep.subr.mxu0 %v1717
        %1881 = vmatpush1.msra.mxu0 %v1716
        %1882 = vmatprep.subr.mxu0 %v1721
        %1883 = vmatpush1.msra.mxu0 %v1720
        %1884 = vmatprep.subr.mxu0 %v1725
        %1885 = vmatpush1.msra.mxu0 %v1724
        %1886 = vmatprep.subr.mxu0 %v1729
        %1887 = vmatpush1.msra.mxu0 %v1728
        %1888 = vmatprep.subr.mxu0 %v1733
        %1889 = vmatpush1.msra.mxu0 %v1732
        %1890 = vmatprep.subr.mxu0 %v1737
        %1891 = vmatpush1.msra.mxu0 %v1736
        %1892 = vmatprep.subr.mxu0 %v1741
        %1893 = vmatpush1.msra.mxu0 %v1740
        %1894 = vmatprep.mubr.f32.mxu0 %v1614
        %1895 = vmatmul.mubr.f32.gmra.mrb[0].mxu0 %v1613
        %v1896 = vpop.f32.mrb[0].mxu0
        %v1897 = vadd.f32 %v1813, %v1896
        %v1898 = vpop.f32.mrb[0].mxu0
        %v1899 = vadd.f32 %v1817, %v1898
        %1900 = vdwg.mxu0
        %1901 = vmatprep.subr.mxu0 %v1745
        %1902 = vmatpush1.msra.mxu0 %v1744
        %1903 = vmatprep.subr.mxu0 %v1749
        %1904 = vmatpush1.msra.mxu0 %v1748
        %1905 = vmatprep.subr.mxu0 %v1753
        %1906 = vmatpush1.msra.mxu0 %v1752
        %1907 = vmatprep.subr.mxu0 %v1757
        %1908 = vmatpush1.msra.mxu0 %v1756
        %1909 = vmatprep.subr.mxu0 %v1761
        %1910 = vmatpush1.msra.mxu0 %v1760
        %1911 = vmatprep.subr.mxu0 %v1765
        %1912 = vmatpush1.msra.mxu0 %v1764
        %1913 = vmatprep.subr.mxu0 %v1769
        %1914 = vmatpush1.msra.mxu0 %v1768
        %1915 = vmatprep.subr.mxu0 %v1773
        %1916 = vmatpush1.msra.mxu0 %v1772
        %1917 = vmatprep.subr.mxu0 %v1777
        %1918 = vmatpush1.msra.mxu0 %v1776
        %1919 = vmatprep.subr.mxu0 %v1781
        %1920 = vmatpush1.msra.mxu0 %v1780
        %1921 = vmatprep.subr.mxu0 %v1785
        %1922 = vmatpush1.msra.mxu0 %v1784
        %1923 = vmatprep.subr.mxu0 %v1789
        %1924 = vmatpush1.msra.mxu0 %v1788
        %1925 = vmatprep.subr.mxu0 %v1793
        %1926 = vmatpush1.msra.mxu0 %v1792
        %1927 = vmatprep.subr.mxu0 %v1797
        %1928 = vmatpush1.msra.mxu0 %v1796
        %1929 = vmatprep.subr.mxu0 %v1801
        %1930 = vmatpush1.msra.mxu0 %v1800
        %1931 = vmatprep.subr.mxu0 %v1805
        %1932 = vmatpush1.msra.mxu0 %v1804
        %1933 = vmatprep.subr.mxu0 0.0
        %1934 = vmatpush1.msra.mxu0 0.0
        %1935 = vmatprep.subr.mxu0 0.0
        %1936 = vmatpush1.msra.mxu0 0.0
        %1937 = vmatprep.subr.mxu0 0.0
        %1938 = vmatpush1.msra.mxu0 0.0
        %1939 = vmatprep.subr.mxu0 0.0
        %1940 = vmatpush1.msra.mxu0 0.0
        %1941 = vmatprep.subr.mxu0 0.0
        %1942 = vmatpush1.msra.mxu0 0.0
        %1943 = vmatprep.subr.mxu0 0.0
        %1944 = vmatpush1.msra.mxu0 0.0
        %1945 = vmatprep.subr.mxu0 0.0
        %1946 = vmatpush1.msra.mxu0 0.0
        %1947 = vmatprep.subr.mxu0 0.0
        %1948 = vmatpush1.msra.mxu0 0.0
        %1949 = vmatprep.subr.mxu0 0.0
        %1950 = vmatpush1.msra.mxu0 0.0
        %1951 = vmatprep.subr.mxu0 0.0
        %1952 = vmatpush1.msra.mxu0 0.0
        %1953 = vmatprep.subr.mxu0 0.0
        %1954 = vmatpush1.msra.mxu0 0.0
        %1955 = vmatprep.subr.mxu0 0.0
        %1956 = vmatpush1.msra.mxu0 0.0
        %1957 = vmatprep.subr.mxu0 0.0
        %1958 = vmatpush1.msra.mxu0 0.0
        %1959 = vmatprep.subr.mxu0 0.0
        %1960 = vmatpush1.msra.mxu0 0.0
        %1961 = vmatprep.subr.mxu0 0.0
        %1962 = vmatpush1.msra.mxu0 0.0
        %1963 = vmatprep.subr.mxu0 0.0
        %1964 = vmatpush1.msra.mxu0 0.0
        %1965 = vmatprep.mubr.f32.mxu0 0.0
        %1966 = vmatmul.mubr.f32.gmra.mrb[0].mxu0 %v1615
        %v1967 = vpop.f32.mrb[0].mxu0
        %v1968 = vadd.f32 %v1897, %v1967
        %v1969 = vpop.f32.mrb[0].mxu0
        %v1970 = vadd.f32 %v1899, %v1969
        %1971 = vdwg.mxu0
        %1972 = vmatprep.subr.mxu0 %v1619
        %1973 = vmatpush1.msra.mxu0 %v1618
        %1974 = vmatprep.subr.mxu0 %v1623
        %1975 = vmatpush1.msra.mxu0 %v1622
        %1976 = vmatprep.subr.mxu0 %v1627
        %1977 = vmatpush1.msra.mxu0 %v1626
        %1978 = vmatprep.subr.mxu0 %v1631
        %1979 = vmatpush1.msra.mxu0 %v1630
        %1980 = vmatprep.subr.mxu0 %v1635
        %1981 = vmatpush1.msra.mxu0 %v1634
        %1982 = vmatprep.subr.mxu0 %v1639
        %1983 = vmatpush1.msra.mxu0 %v1638
        %1984 = vmatprep.subr.mxu0 %v1643
        %1985 = vmatpush1.msra.mxu0 %v1642
        %1986 = vmatprep.subr.mxu0 %v1647
        %1987 = vmatpush1.msra.mxu0 %v1646
        %1988 = vmatprep.subr.mxu0 %v1651
        %1989 = vmatpush1.msra.mxu0 %v1650
        %1990 = vmatprep.subr.mxu0 %v1655
        %1991 = vmatpush1.msra.mxu0 %v1654
        %1992 = vmatprep.subr.mxu0 %v1659
        %1993 = vmatpush1.msra.mxu0 %v1658
        %1994 = vmatprep.subr.mxu0 %v1663
        %1995 = vmatpush1.msra.mxu0 %v1662
        %1996 = vmatprep.subr.mxu0 %v1667
        %1997 = vmatpush1.msra.mxu0 %v1666
        %1998 = vmatprep.subr.mxu0 %v1671
        %1999 = vmatpush1.msra.mxu0 %v1670
        %2000 = vmatprep.subr.mxu0 %v1675
        %2001 = vmatpush1.msra.mxu0 %v1674
        %2002 = vmatprep.subr.mxu0 %v1679
        %2003 = vmatpush1.msra.mxu0 %v1678
        %2004 = vmatprep.subr.mxu0 %v1683
        %2005 = vmatpush1.msra.mxu0 %v1682
        %2006 = vmatprep.subr.mxu0 %v1687
        %2007 = vmatpush1.msra.mxu0 %v1686
        %2008 = vmatprep.subr.mxu0 %v1691
        %2009 = vmatpush1.msra.mxu0 %v1690
        %2010 = vmatprep.subr.mxu0 %v1695
        %2011 = vmatpush1.msra.mxu0 %v1694
        %2012 = vmatprep.subr.mxu0 %v1699
        %2013 = vmatpush1.msra.mxu0 %v1698
        %2014 = vmatprep.subr.mxu0 %v1703
        %2015 = vmatpush1.msra.mxu0 %v1702
        %2016 = vmatprep.subr.mxu0 %v1707
        %2017 = vmatpush1.msra.mxu0 %v1706
        %2018 = vmatprep.subr.mxu0 %v1711
        %2019 = vmatpush1.msra.mxu0 %v1710
        %2020 = vmatprep.subr.mxu0 %v1715
        %2021 = vmatpush1.msra.mxu0 %v1714
        %2022 = vmatprep.subr.mxu0 %v1719
        %2023 = vmatpush1.msra.mxu0 %v1718
        %2024 = vmatprep.subr.mxu0 %v1723
        %2025 = vmatpush1.msra.mxu0 %v1722
        %2026 = vmatprep.subr.mxu0 %v1727
        %2027 = vmatpush1.msra.mxu0 %v1726
        %2028 = vmatprep.subr.mxu0 %v1731
        %2029 = vmatpush1.msra.mxu0 %v1730
        %2030 = vmatprep.subr.mxu0 %v1735
        %2031 = vmatpush1.msra.mxu0 %v1734
        %2032 = vmatprep.subr.mxu0 %v1739
        %2033 = vmatpush1.msra.mxu0 %v1738
        %2034 = vmatprep.subr.mxu0 %v1743
        %2035 = vmatpush1.msra.mxu0 %v1742
        %2036 = vmatprep.mubr.f32.mxu0 %v1614
        %2037 = vmatmul.mubr.f32.gmra.mrb[0].mxu0 %v1613
        %v2038 = vpop.f32.mrb[0].mxu0
        %v2039 = vadd.f32 %v1821, %v2038
        %v2040 = vpop.f32.mrb[0].mxu0
        %v2041 = vadd.f32 %v1825, %v2040
        %2042 = vdwg.mxu0
        %2043 = vmatprep.subr.mxu0 %v1747
        %2044 = vmatpush1.msra.mxu0 %v1746
        %2045 = vmatprep.subr.mxu0 %v1751
        %2046 = vmatpush1.msra.mxu0 %v1750
        %2047 = vmatprep.subr.mxu0 %v1755
        %2048 = vmatpush1.msra.mxu0 %v1754
        %2049 = vmatprep.subr.mxu0 %v1759
        %2050 = vmatpush1.msra.mxu0 %v1758
        %2051 = vmatprep.subr.mxu0 %v1763
        %2052 = vmatpush1.msra.mxu0 %v1762
        %2053 = vmatprep.subr.mxu0 %v1767
        %2054 = vmatpush1.msra.mxu0 %v1766
        %2055 = vmatprep.subr.mxu0 %v1771
        %2056 = vmatpush1.msra.mxu0 %v1770
        %2057 = vmatprep.subr.mxu0 %v1775
        %2058 = vmatpush1.msra.mxu0 %v1774
        %2059 = vmatprep.subr.mxu0 %v1779
        %2060 = vmatpush1.msra.mxu0 %v1778
        %2061 = vmatprep.subr.mxu0 %v1783
        %2062 = vmatpush1.msra.mxu0 %v1782
        %2063 = vmatprep.subr.mxu0 %v1787
        %2064 = vmatpush1.msra.mxu0 %v1786
        %2065 = vmatprep.subr.mxu0 %v1791
        %2066 = vmatpush1.msra.mxu0 %v1790
        %2067 = vmatprep.subr.mxu0 %v1795
        %2068 = vmatpush1.msra.mxu0 %v1794
        %2069 = vmatprep.subr.mxu0 %v1799
        %2070 = vmatpush1.msra.mxu0 %v1798
        %2071 = vmatprep.subr.mxu0 %v1803
        %2072 = vmatpush1.msra.mxu0 %v1802
        %2073 = vmatprep.subr.mxu0 %v1807
        %2074 = vmatpush1.msra.mxu0 %v1806
        %2075 = vmatprep.subr.mxu0 0.0
        %2076 = vmatpush1.msra.mxu0 0.0
        %2077 = vmatprep.subr.mxu0 0.0
        %2078 = vmatpush1.msra.mxu0 0.0
        %2079 = vmatprep.subr.mxu0 0.0
        %2080 = vmatpush1.msra.mxu0 0.0
        %2081 = vmatprep.subr.mxu0 0.0
        %2082 = vmatpush1.msra.mxu0 0.0
        %2083 = vmatprep.subr.mxu0 0.0
        %2084 = vmatpush1.msra.mxu0 0.0
        %2085 = vmatprep.subr.mxu0 0.0
        %2086 = vmatpush1.msra.mxu0 0.0
        %2087 = vmatprep.subr.mxu0 0.0
        %2088 = vmatpush1.msra.mxu0 0.0
        %2089 = vmatprep.subr.mxu0 0.0
        %2090 = vmatpush1.msra.mxu0 0.0
        %2091 = vmatprep.subr.mxu0 0.0
        %2092 = vmatpush1.msra.mxu0 0.0
        %2093 = vmatprep.subr.mxu0 0.0
        %2094 = vmatpush1.msra.mxu0 0.0
        %2095 = vmatprep.subr.mxu0 0.0
        %2096 = vmatpush1.msra.mxu0 0.0
        %2097 = vmatprep.subr.mxu0 0.0
        %2098 = vmatpush1.msra.mxu0 0.0
        %2099 = vmatprep.subr.mxu0 0.0
        %2100 = vmatpush1.msra.mxu0 0.0
        %2101 = vmatprep.subr.mxu0 0.0
        %2102 = vmatpush1.msra.mxu0 0.0
        %2103 = vmatprep.subr.mxu0 0.0
        %2104 = vmatpush1.msra.mxu0 0.0
        %2105 = vmatprep.subr.mxu0 0.0
        %2106 = vmatpush1.msra.mxu0 0.0
        %2107 = vmatprep.mubr.f32.mxu0 0.0
        %2108 = vmatmul.mubr.f32.gmra.mrb[0].mxu0 %v1615
        %v2109 = vpop.f32.mrb[0].mxu0
        %v2110 = vadd.f32 %v2039, %v2109
        %v2111 = vpop.f32.mrb[0].mxu0
        %v2112 = vadd.f32 %v2041, %v2111
        %2113 = vdwg.mxu0
        %v2114 = vmul.f32 %v1968, 0.01
        %v2115 = vmul.f32 %v1970, 0.01
        %v2116 = vmul.f32 %v2110, 0.01
        %v2117 = vmul.f32 %v2112, 0.01
        %v2118 = vmax.f32 %v1968, %v2114
        %v2119 = vmax.f32 %v1970, %v2115
        %v2120 = vmax.f32 %v2110, %v2116
        %v2121 = vmax.f32 %v2112, %v2117
        %v2122 = vld [vmem:[%s11] sm:$0xff]
        %v2123 = vld [vmem:[%s11 + $0x8] sm:$0xff]
        %v2124 = vld [vmem:[%s11 + $0x10] sm:$0xff]
        %v2125 = vld [vmem:[%s11 + $0x18] sm:$0xff]
        %v2126 = vld [vmem:[%s11 + $0x20] sm:$0xff]
        %v2127 = vld [vmem:[%s11 + $0x28] sm:$0xff]
        %v2128 = vld [vmem:[%s11 + $0x30] sm:$0xff]
        %v2129 = vld [vmem:[%s11 + $0x38] sm:$0xff]
        %v2130 = vld [vmem:[%s11 + $0x40] sm:$0xff]
        %v2131 = vld [vmem:[%s11 + $0x48] sm:$0xff]
        %v2132 = vld [vmem:[%s11 + $0x50] sm:$0xff]
        %v2133 = vld [vmem:[%s11 + $0x58] sm:$0xff]
        %v2134 = vld [vmem:[%s11 + $0x60] sm:$0xff]
        %v2135 = vld [vmem:[%s11 + $0x68] sm:$0xff]
        %v2136 = vld [vmem:[%s11 + $0x70] sm:$0xff]
        %v2137 = vld [vmem:[%s11 + $0x78] sm:$0xff]
        %v2138 = vld [vmem:[%s11 + $0x80] sm:$0xff]
        %v2139 = vld [vmem:[%s11 + $0x88] sm:$0xff]
        %v2140 = vld [vmem:[%s11 + $0x90] sm:$0xff]
        %v2141 = vld [vmem:[%s11 + $0x98] sm:$0xff]
        %v2142 = vld [vmem:[%s11 + $0xa0] sm:$0xff]
        %v2143 = vld [vmem:[%s11 + $0xa8] sm:$0xff]
        %v2144 = vld [vmem:[%s11 + $0xb0] sm:$0xff]
        %v2145 = vld [vmem:[%s11 + $0xb8] sm:$0xff]
        %v2146 = vld [vmem:[%s11 + $0xc0] sm:$0xff]
        %v2147 = vld [vmem:[%s11 + $0xc8] sm:$0xff]
        %v2148 = vld [vmem:[%s11 + $0xd0] sm:$0xff]
        %v2149 = vld [vmem:[%s11 + $0xd8] sm:$0xff]
        %v2150 = vld [vmem:[%s11 + $0xe0] sm:$0xff]
        %v2151 = vld [vmem:[%s11 + $0xe8] sm:$0xff]
        %v2152 = vld [vmem:[%s11 + $0xf0] sm:$0xff]
        %v2153 = vld [vmem:[%s11 + $0xf8] sm:$0xff]
        %v2154 = vld [vmem:[%s11 + $0x100] sm:$0xff]
        %v2155 = vld [vmem:[%s11 + $0x108] sm:$0xff]
        %v2156 = vld [vmem:[%s11 + $0x110] sm:$0xff]
        %v2157 = vld [vmem:[%s11 + $0x118] sm:$0xff]
        %v2158 = vld [vmem:[%s11 + $0x120] sm:$0xff]
        %v2159 = vld [vmem:[%s11 + $0x128] sm:$0xff]
        %v2160 = vld [vmem:[%s11 + $0x130] sm:$0xff]
        %v2161 = vld [vmem:[%s11 + $0x138] sm:$0xff]
        %v2162 = vld [vmem:[%s11 + $0x140] sm:$0xff]
        %v2163 = vld [vmem:[%s11 + $0x148] sm:$0xff]
        %v2164 = vld [vmem:[%s11 + $0x150] sm:$0xff]
        %v2165 = vld [vmem:[%s11 + $0x158] sm:$0xff]
        %v2166 = vld [vmem:[%s11 + $0x160] sm:$0xff]
        %v2167 = vld [vmem:[%s11 + $0x168] sm:$0xff]
        %v2168 = vld [vmem:[%s11 + $0x170] sm:$0xff]
        %v2169 = vld [vmem:[%s11 + $0x178] sm:$0xff]
        %v2170 = vld [vmem:[%s11 + $0x180] sm:$0xff]
        %v2171 = vld [vmem:[%s11 + $0x188] sm:$0xff]
        %v2172 = vld [vmem:[%s11 + $0x190] sm:$0xff]
        %v2173 = vld [vmem:[%s11 + $0x198] sm:$0xff]
        %v2174 = vld [vmem:[%s11 + $0x1a0] sm:$0xff]
        %v2175 = vld [vmem:[%s11 + $0x1a8] sm:$0xff]
        %v2176 = vld [vmem:[%s11 + $0x1b0] sm:$0xff]
        %v2177 = vld [vmem:[%s11 + $0x1b8] sm:$0xff]
        %v2178 = vld [vmem:[%s11 + $0x1c0] sm:$0xff]
        %v2179 = vld [vmem:[%s11 + $0x1c8] sm:$0xff]
        %v2180 = vld [vmem:[%s11 + $0x1d0] sm:$0xff]
        %v2181 = vld [vmem:[%s11 + $0x1d8] sm:$0xff]
        %v2182 = vld [vmem:[%s11 + $0x1e0] sm:$0xff]
        %v2183 = vld [vmem:[%s11 + $0x1e8] sm:$0xff]
        %v2184 = vld [vmem:[%s11 + $0x1f0] sm:$0xff]
        %v2185 = vld [vmem:[%s11 + $0x1f8] sm:$0xff]
        %v2186 = vld [vmem:[%s12] sm:$0x1]
        %v2188 = vlaneseq
        %v2189 = vshrl.u32 %v2188, 7
        %v2190 = vsub.s32 0, %v2189
        %v2191 = vrot.slane %v2186, %v2190
        %2193 = vmatprep.subr.mxu0 0.0
        %2194 = vmatpush1.msra.mxu0 %v2122
        %2195 = vmatprep.subr.mxu0 0.0
        %2196 = vmatpush1.msra.mxu0 %v2123
        %2197 = vmatprep.subr.mxu0 0.0
        %2198 = vmatpush1.msra.mxu0 %v2124
        %2199 = vmatprep.subr.mxu0 0.0
        %2200 = vmatpush1.msra.mxu0 %v2125
        %2201 = vmatprep.subr.mxu0 0.0
        %2202 = vmatpush1.msra.mxu0 %v2126
        %2203 = vmatprep.subr.mxu0 0.0
        %2204 = vmatpush1.msra.mxu0 %v2127
        %2205 = vmatprep.subr.mxu0 0.0
        %2206 = vmatpush1.msra.mxu0 %v2128
        %2207 = vmatprep.subr.mxu0 0.0
        %2208 = vmatpush1.msra.mxu0 %v2129
        %2209 = vmatprep.subr.mxu0 0.0
        %2210 = vmatpush1.msra.mxu0 %v2130
        %2211 = vmatprep.subr.mxu0 0.0
        %2212 = vmatpush1.msra.mxu0 %v2131
        %2213 = vmatprep.subr.mxu0 0.0
        %2214 = vmatpush1.msra.mxu0 %v2132
        %2215 = vmatprep.subr.mxu0 0.0
        %2216 = vmatpush1.msra.mxu0 %v2133
        %2217 = vmatprep.subr.mxu0 0.0
        %2218 = vmatpush1.msra.mxu0 %v2134
        %2219 = vmatprep.subr.mxu0 0.0
        %2220 = vmatpush1.msra.mxu0 %v2135
        %2221 = vmatprep.subr.mxu0 0.0
        %2222 = vmatpush1.msra.mxu0 %v2136
        %2223 = vmatprep.subr.mxu0 0.0
        %2224 = vmatpush1.msra.mxu0 %v2137
        %2225 = vmatprep.subr.mxu0 0.0
        %2226 = vmatpush1.msra.mxu0 %v2138
        %2227 = vmatprep.subr.mxu0 0.0
        %2228 = vmatpush1.msra.mxu0 %v2139
        %2229 = vmatprep.subr.mxu0 0.0
        %2230 = vmatpush1.msra.mxu0 %v2140
        %2231 = vmatprep.subr.mxu0 0.0
        %2232 = vmatpush1.msra.mxu0 %v2141
        %2233 = vmatprep.subr.mxu0 0.0
        %2234 = vmatpush1.msra.mxu0 %v2142
        %2235 = vmatprep.subr.mxu0 0.0
        %2236 = vmatpush1.msra.mxu0 %v2143
        %2237 = vmatprep.subr.mxu0 0.0
        %2238 = vmatpush1.msra.mxu0 %v2144
        %2239 = vmatprep.subr.mxu0 0.0
        %2240 = vmatpush1.msra.mxu0 %v2145
        %2241 = vmatprep.subr.mxu0 0.0
        %2242 = vmatpush1.msra.mxu0 %v2146
        %2243 = vmatprep.subr.mxu0 0.0
        %2244 = vmatpush1.msra.mxu0 %v2147
        %2245 = vmatprep.subr.mxu0 0.0
        %2246 = vmatpush1.msra.mxu0 %v2148
        %2247 = vmatprep.subr.mxu0 0.0
        %2248 = vmatpush1.msra.mxu0 %v2149
        %2249 = vmatprep.subr.mxu0 0.0
        %2250 = vmatpush1.msra.mxu0 %v2150
        %2251 = vmatprep.subr.mxu0 0.0
        %2252 = vmatpush1.msra.mxu0 %v2151
        %2253 = vmatprep.subr.mxu0 0.0
        %2254 = vmatpush1.msra.mxu0 %v2152
        %2255 = vmatprep.subr.mxu0 0.0
        %2256 = vmatpush1.msra.mxu0 %v2153
        %2257 = vmatprep.mubr.f32.mxu0 %v2119
        %2258 = vmatmul.mubr.f32.gmra.mrb[0].mxu0 %v2118
        %v2259 = vpop.f32.mrb[0].mxu0
        %v2260 = vadd.f32 %v2191, %v2259
        %v2261 = vpop.f32.mrb[0].mxu0
        %2262 = vdwg.mxu0
        %2263 = vmatprep.subr.mxu0 0.0
        %2264 = vmatpush1.msra.mxu0 %v2154
        %2265 = vmatprep.subr.mxu0 0.0
        %2266 = vmatpush1.msra.mxu0 %v2155
        %2267 = vmatprep.subr.mxu0 0.0
        %2268 = vmatpush1.msra.mxu0 %v2156
        %2269 = vmatprep.subr.mxu0 0.0
        %2270 = vmatpush1.msra.mxu0 %v2157
        %2271 = vmatprep.subr.mxu0 0.0
        %2272 = vmatpush1.msra.mxu0 %v2158
        %2273 = vmatprep.subr.mxu0 0.0
        %2274 = vmatpush1.msra.mxu0 %v2159
        %2275 = vmatprep.subr.mxu0 0.0
        %2276 = vmatpush1.msra.mxu0 %v2160
        %2277 = vmatprep.subr.mxu0 0.0
        %2278 = vmatpush1.msra.mxu0 %v2161
        %2279 = vmatprep.subr.mxu0 0.0
        %2280 = vmatpush1.msra.mxu0 %v2162
        %2281 = vmatprep.subr.mxu0 0.0
        %2282 = vmatpush1.msra.mxu0 %v2163
        %2283 = vmatprep.subr.mxu0 0.0
        %2284 = vmatpush1.msra.mxu0 %v2164
        %2285 = vmatprep.subr.mxu0 0.0
        %2286 = vmatpush1.msra.mxu0 %v2165
        %2287 = vmatprep.subr.mxu0 0.0
        %2288 = vmatpush1.msra.mxu0 %v2166
        %2289 = vmatprep.subr.mxu0 0.0
        %2290 = vmatpush1.msra.mxu0 %v2167
        %2291 = vmatprep.subr.mxu0 0.0
        %2292 = vmatpush1.msra.mxu0 %v2168
        %2293 = vmatprep.subr.mxu0 0.0
        %2294 = vmatpush1.msra.mxu0 %v2169
        %2295 = vmatprep.subr.mxu0 0.0
        %2296 = vmatpush1.msra.mxu0 %v2170
        %2297 = vmatprep.subr.mxu0 0.0
        %2298 = vmatpush1.msra.mxu0 %v2171
        %2299 = vmatprep.subr.mxu0 0.0
        %2300 = vmatpush1.msra.mxu0 %v2172
        %2301 = vmatprep.subr.mxu0 0.0
        %2302 = vmatpush1.msra.mxu0 %v2173
        %2303 = vmatprep.subr.mxu0 0.0
        %2304 = vmatpush1.msra.mxu0 %v2174
        %2305 = vmatprep.subr.mxu0 0.0
        %2306 = vmatpush1.msra.mxu0 %v2175
        %2307 = vmatprep.subr.mxu0 0.0
        %2308 = vmatpush1.msra.mxu0 %v2176
        %2309 = vmatprep.subr.mxu0 0.0
        %2310 = vmatpush1.msra.mxu0 %v2177
        %2311 = vmatprep.subr.mxu0 0.0
        %2312 = vmatpush1.msra.mxu0 %v2178
        %2313 = vmatprep.subr.mxu0 0.0
        %2314 = vmatpush1.msra.mxu0 %v2179
        %2315 = vmatprep.subr.mxu0 0.0
        %2316 = vmatpush1.msra.mxu0 %v2180
        %2317 = vmatprep.subr.mxu0 0.0
        %2318 = vmatpush1.msra.mxu0 %v2181
        %2319 = vmatprep.subr.mxu0 0.0
        %2320 = vmatpush1.msra.mxu0 %v2182
        %2321 = vmatprep.subr.mxu0 0.0
        %2322 = vmatpush1.msra.mxu0 %v2183
        %2323 = vmatprep.subr.mxu0 0.0
        %2324 = vmatpush1.msra.mxu0 %v2184
        %2325 = vmatprep.subr.mxu0 0.0
        %2326 = vmatpush1.msra.mxu0 %v2185
        %2327 = vmatprep.mubr.f32.mxu0 %v2121
        %2328 = vmatmul.mubr.f32.gmra.mrb[0].mxu0 %v2120
        %v2329 = vpop.f32.mrb[0].mxu0
        %v2330 = vadd.f32 %v2260, %v2329
        %v2331 = vpop.f32.mrb[0].mxu0
        %2332 = vdwg.mxu0
        %2333 = vst [vmem:[%s469] sm:$0xff] %v2330
        %s2334 = sand.u32 %s318, 1
        %s2335 = scalar_lea.sflag [#allocation3], %s2334
        %s2336 = sand.u32 %s318, 1
        %s2337 = smul.addr %s2336, 8
        %s2338 = scalar_lea.vmem [#allocation2], %s2337
        %s2339 = sand.u32 %s344, 1
        %s2340 = scalar_lea.sflag [#allocation5], %s2339
        %s2341 = sand.u32 %s344, 1
        %s2342 = smul.addr %s2341, 8
        %s2343 = scalar_lea.vmem [#allocation4], %s2342
        // Predicated region
        $region73: #{autoencoder_forward.1} parent=71 // pred_check
          %p2344 = pneg %p328
        $region74: #{autoencoder_forward.1} parent=71 // pred_check_branch
          %2346 = sbr.rel (%p2344) target = $region76
        $region75: #{autoencoder_forward.1} parent=71 // pred_region
          %s2348 = ssub.s32 128, 128
          %2349 = vsyncadd %s2335, %s2348
          %s2350 = smul.addr %s32, 128
          %s2351 = scalar_lea.hbm %s13, %s2350
          %s2353 = sshll.u32 %s2338, 4
          %s2354 = int_to_ptr.vmem [resolvable:$true] %s2353
          %2356 = dma.vmem_to_hbm [thread:$0]  %s2354, 128, %s2351, %s2335
        $region76: #{autoencoder_forward.1} parent=71 // pred_fallthru
          _
        // Predicated region
        $region77: #{autoencoder_forward.1} parent=71 // pred_check
          %p2357 = pneg %p354
        $region78: #{autoencoder_forward.1} parent=71 // pred_check_branch
          %2359 = sbr.rel (%p2357) target = $region80
        $region79: #{autoencoder_forward.1} parent=71 // pred_region
          %s2361 = ssub.s32 128, 128
          %2362 = vsyncadd %s2340, %s2361
          %s2363 = smul.addr %s32, 128
          %s2364 = scalar_lea.hbm %s14, %s2363
          %s2366 = sshll.u32 %s2343, 4
          %s2367 = int_to_ptr.vmem [resolvable:$true] %s2366
          %2369 = dma.vmem_to_hbm [thread:$0]  %s2367, 128, %s2364, %s2340
        $region80: #{autoencoder_forward.1} parent=71 // pred_fallthru
          _
      $region72: #{autoencoder_forward.1} parent=5 // pred_fallthru
        _
      %p2370 = scmp.le.s32.totalorder 2, %s27
      // Predicated region
      $region81: #{autoencoder_forward.1} parent=5 // pred_check
        %p2371 = pneg %p2370
      $region82: #{autoencoder_forward.1} parent=5 // pred_check_branch
        %2373 = sbr.rel (%p2371) target = $region84
      $region83: #{autoencoder_forward.1} parent=5 // pred_region
        %s2374 = ssub.s32 %s27, 2
        // Predicated region
        $region85: #{autoencoder_forward.1} parent=83 // pred_check
          %p2375 = pneg %p334
        $region86: #{autoencoder_forward.1} parent=83 // pred_check_branch
          %2377 = sbr.rel (%p2375) target = $region88
        $region87: #{autoencoder_forward.1} parent=83 // pred_region
          %s2378 = sand.u32 %s319, 1
          %s2379 = scalar_lea.sflag [#allocation3], %s2378
          %s2380 = sand.u32 %s319, 1
          %s2381 = smul.addr %s2380, 8
          %s2382 = scalar_lea.vmem [#allocation2], %s2381
          %2383 = dma.done %s2379, 128
        $region88: #{autoencoder_forward.1} parent=83 // pred_fallthru
          _
        // Predicated region
        $region89: #{autoencoder_forward.1} parent=83 // pred_check
          %p2384 = pneg %p360
        $region90: #{autoencoder_forward.1} parent=83 // pred_check_branch
          %2386 = sbr.rel (%p2384) target = $region92
        $region91: #{autoencoder_forward.1} parent=83 // pred_region
          %s2387 = sand.u32 %s345, 1
          %s2388 = scalar_lea.sflag [#allocation5], %s2387
          %s2389 = sand.u32 %s345, 1
          %s2390 = smul.addr %s2389, 8
          %s2391 = scalar_lea.vmem [#allocation4], %s2390
          %2392 = dma.done %s2388, 128
        $region92: #{autoencoder_forward.1} parent=83 // pred_fallthru
          _
      $region84: #{autoencoder_forward.1} parent=5 // pred_fallthru
        _
    $region6: #{autoencoder_forward.1} parent=1 // loop_footer
      %s31 = sadd.s32 1, %s27
    $region7: #{autoencoder_forward.1} parent=1 // loop_footer_branch
      %26 = sbr.rel target = $region3
    $region8: #{autoencoder_forward.1} parent=1 // loop_exit
      _
    %2393 = vsyncpa [#allocation3], 1
    %s2394 = scalar_lea.sflag [#allocation3], 1
    %2395 = vsyncpa %s2394, 1
    %2396 = vsyncpa [#allocation5], 1
    %s2397 = scalar_lea.sflag [#allocation5], 1
    %2398 = vsyncpa %s2397, 1

</llo_original>
